<compile_context>
chip_gen: v6e
topology: v6e:2x2x1
jax: 0.10.0
libtpu: 0.0.40
codegen_flags: <defaults>
</compile_context>

<pallas_src>
import dataclasses
import functools

import jax
import jax.numpy as jnp
from jax.experimental import pallas as pl
from jax.experimental.pallas import tpu as pltpu

BN_EPS = 1e-5

_HAS_PIPELINE_MODE = (
    hasattr(pl, "Buffered")
    and dataclasses.is_dataclass(pl.BlockSpec)
    and "pipeline_mode" in {f.name for f in dataclasses.fields(pl.BlockSpec)}
)

_VMEM_BUDGET = 14 * 1024 * 1024  # stay under v5e's ~16 MiB scoped-VMEM default


# --------------------------------------------------------------------------- #
# Kernels
# --------------------------------------------------------------------------- #
def _stage1_kernel(x_ref, w1_ref, h_ref, bsum_ref, bsumsq_ref):
    """Per batch tile: h = x @ w1 (bf16 MXU, f32 acc) + per-tile batch stats."""
    x = x_ref[...].astype(jnp.bfloat16)
    h = jnp.dot(x, w1_ref[...], preferred_element_type=jnp.float32)  # [tb, H] f32

    # Per-tile batch statistics in f32 (before the bf16 store), on the XLU
    # (cross-sublane reduce) while the MXU is the busy unit here.
    bsum_ref[...] = jnp.sum(h, axis=0, keepdims=True)[None]          # [1,1,H]
    bsumsq_ref[...] = jnp.sum(h * h, axis=0, keepdims=True)[None]    # [1,1,H]

    # NOTE: layer1's Linear bias is intentionally NOT added — the batch-mean
    # subtraction of training-mode BatchNorm cancels it exactly.
    h_ref[...] = h.astype(h_ref.dtype)                               # bf16 store


def _stage2_kernel(h_ref, scale_ref, shift_ref, w2_ref, b2_ref, out_ref):
    """Per batch tile: folded BN scale/shift -> ReLU -> Linear2 (bf16 MXU)."""
    h = h_ref[...].astype(jnp.float32) * scale_ref[...] + shift_ref[...]
    h = jnp.maximum(h, 0.0)
    y = jnp.dot(h.astype(jnp.bfloat16), w2_ref[...],
                preferred_element_type=jnp.float32) + b2_ref[...]
    out_ref[...] = y.astype(out_ref.dtype)


# --------------------------------------------------------------------------- #
# Tiling helpers
# --------------------------------------------------------------------------- #
def _pick_block_b(batch, d_in, hidden, d_out, io_itemsize):
    """Largest batch tile subject to (a) >=4 even tiles when achievable (keeps
    both v7x TensorCores busy and the DMA pipeline primed) and (b) an estimated
    double-buffered VMEM footprint under v5e's ~16 MiB scoped default."""

    def fits(tb):
        # stage 1: 2x x tile + w1 (bf16, worst-case double buffered) + 2x bf16 h
        s1 = 2 * tb * d_in * io_itemsize + 2 * d_in * hidden * 2 + 2 * tb * hidden * 2
        # stage 2: 2x bf16 h tile + w2 (bf16) + 2x out tile (+ tiny vectors)
        s2 = 2 * tb * hidden * 2 + 2 * hidden * d_out * 2 + 2 * tb * d_out * io_itemsize
        return max(s1, s2) <= _VMEM_BUDGET

    divisors = [c for c in (512, 256, 128, 64, 32, 16, 8) if batch % c == 0]
    for c in divisors:                       # prefer >=4 even tiles (v7x megacore)
        n = batch // c
        if n >= 4 and n % 2 == 0 and fits(c):
            return c
    for c in divisors:                       # relax the tile-count preference
        if fits(c):
            return c
    return divisors[-1] if divisors else batch


# --------------------------------------------------------------------------- #
# Forward wrapper
# --------------------------------------------------------------------------- #
def prediction_mlp(x, w1, b1, gamma, beta, w2, b2, *, block_b=None,
                   single_buffer_resident=None):
    """SimSiam PredictionMLP forward (training-mode BatchNorm statistics).

    b1 is accepted for API parity with nn.Linear but is unused inside the
    kernel: it is cancelled exactly by the batch-mean subtraction of
    training-mode BatchNorm (this would not hold for inference-mode BN).
    """
    del b1
    B, d_in = x.shape
    hidden = w1.shape[-1]
    d_out = w2.shape[-1]

    if single_buffer_resident is None:
        single_buffer_resident = _HAS_PIPELINE_MODE
    if block_b is None:
        block_b = _pick_block_b(B, d_in, hidden, d_out, x.dtype.itemsize)
    assert B % block_b == 0, "batch must be divisible by the batch tile"
    n_tiles = B // block_b

    # bf16 weights: MXU-native, half the HBM/VMEM bytes. Callers should ship
    # bf16 weights once (see prepare_params) so this cast is a no-op per forward.
    w1_bf = w1 if w1.dtype == jnp.bfloat16 else w1.astype(jnp.bfloat16)
    w2_bf = w2 if w2.dtype == jnp.bfloat16 else w2.astype(jnp.bfloat16)

    def resident(shape):
        # Grid-invariant operand: single-buffer it when supported (its index_map
        # never changes, so the second buffer would be pure wasted VMEM).
        if single_buffer_resident:
            return pl.BlockSpec(shape, lambda i: (0, 0), pipeline_mode=pl.Buffered(1))
        return pl.BlockSpec(shape, lambda i: (0, 0))

    parallel = pltpu.CompilerParams(dimension_semantics=("parallel",))

    # ---- stage 1: x @ w1 + per-tile batch statistics -----------------------
    h, bsum, bsumsq = pl.pallas_call(
        _stage1_kernel,
        grid=(n_tiles,),
        in_specs=[
            pl.BlockSpec((block_b, d_in), lambda i: (i, 0)),    # x streams
            resident((d_in, hidden)),                           # w1 resident
        ],
        out_specs=[
            pl.BlockSpec((block_b, hidden), lambda i: (i, 0)),  # h streams (bf16)
            pl.BlockSpec((1, 1, hidden), lambda i: (i, 0, 0)),  # partial sum
            pl.BlockSpec((1, 1, hidden), lambda i: (i, 0, 0)),  # partial sumsq
        ],
        out_shape=[
            jax.ShapeDtypeStruct((B, hidden), jnp.bfloat16),
            jax.ShapeDtypeStruct((n_tiles, 1, hidden), jnp.float32),
            jax.ShapeDtypeStruct((n_tiles, 1, hidden), jnp.float32),
        ],
        compiler_params=parallel,
    )(x, w1_bf)

    # Tiny cross-tile stats combine + BatchNorm fold ([1,H] f32 work) in plain JAX.
    mean = jnp.sum(bsum, axis=0) / B
    var = jnp.maximum(jnp.sum(bsumsq, axis=0) / B - mean * mean, 0.0)  # biased, clamped
    scale = gamma * jax.lax.rsqrt(var + BN_EPS)                        # [1, H]
    shift = beta - mean * scale                                        # [1, H]

    # ---- stage 2: folded BN -> ReLU -> @ w2 + b2 ----------------------------
    out = pl.pallas_call(
        _stage2_kernel,
        grid=(n_tiles,),
        in_specs=[
            pl.BlockSpec((block_b, hidden), lambda i: (i, 0)),  # h streams (bf16)
            resident((1, hidden)),                              # folded scale
            resident((1, hidden)),                              # folded shift
            resident((hidden, d_out)),                          # w2 resident
            resident((1, d_out)),                               # b2
        ],
        out_specs=pl.BlockSpec((block_b, d_out), lambda i: (i, 0)),
        out_shape=jax.ShapeDtypeStruct((B, d_out), x.dtype),
        compiler_params=parallel,
    )(h, scale, shift, w2_bf, b2)
    return out


# --------------------------------------------------------------------------- #
# Params / reference
# --------------------------------------------------------------------------- #
def init_params(key, in_dim):
    """Deterministic init mimicking PyTorch nn.Linear defaults (uniform ±1/sqrt(fan_in))."""
    hidden_dim = in_dim // 4
    out_dim = in_dim
    k1, k2, k3, k4 = jax.random.split(key, 4)

    bound1 = 1.0 / (in_dim ** 0.5)
    w1 = jax.random.uniform(k1, (in_dim, hidden_dim), jnp.float32, -bound1, bound1)
    b1 = jax.random.uniform(k2, (1, hidden_dim), jnp.float32, -bound1, bound1)

    gamma = jnp.ones((1, hidden_dim), jnp.float32)
    beta = jnp.zeros((1, hidden_dim), jnp.float32)

    bound2 = 1.0 / (hidden_dim ** 0.5)
    w2 = jax.random.uniform(k3, (hidden_dim, out_dim), jnp.float32, -bound2, bound2)
    b2 = jax.random.uniform(k4, (1, out_dim), jnp.float32, -bound2, bound2)

    return w1, b1, gamma, beta, w2, b2


def prepare_params(w1, b1, gamma, beta, w2, b2):
    """One-time weight conversion to bf16, hoisted out of the per-forward path."""
    return (w1.astype(jnp.bfloat16), b1, gamma, beta, w2.astype(jnp.bfloat16), b2)


def reference(x, w1, b1, gamma, beta, w2, b2):
    """Pure-JAX f32 reference with exact PyTorch training-mode semantics (incl. b1)."""
    h = x @ w1 + b1
    mean = h.mean(axis=0, keepdims=True)
    var = ((h - mean) ** 2).mean(axis=0, keepdims=True)   # biased, as in BN training
    h = (h - mean) / jnp.sqrt(var + BN_EPS) * gamma + beta
    h = jnp.maximum(h, 0.0)
    return h @ w2 + b2


if __name__ == "__main__":
    key = jax.random.PRNGKey(0)
    kx, kp = jax.random.split(key)

    # Small but lane-aligned demo shapes: hidden = in_dim // 4 = 128.
    B, in_dim = 64, 512
    x = jax.random.normal(kx, (B, in_dim), jnp.float32)
    params_f32 = init_params(kp, in_dim)
    params = prepare_params(*params_f32)        # bf16 weights, converted once

    fwd = jax.jit(prediction_mlp)
    try:
        y = jax.block_until_ready(fwd(x, *params))
    except Exception:
        # Some JAX versions accept pipeline_mode=pl.Buffered(1) at BlockSpec
        # construction but not at Mosaic lowering; retry with the default
        # double-buffered resident operands (same kernels, same semantics).
        if not _HAS_PIPELINE_MODE:
            raise
        fwd = jax.jit(functools.partial(prediction_mlp, single_buffer_resident=False))
        y = jax.block_until_ready(fwd(x, *params))

    y_ref = reference(x, *params_f32)
    assert y.shape == (B, in_dim)
    max_err = float(jnp.max(jnp.abs(y - y_ref)))
    # bf16 matmul operands + bf16 h storage -> loose tolerance vs the f32 reference.
    assert jnp.allclose(y, y_ref, atol=5e-2, rtol=5e-2), f"max abs err {max_err}"
    print("KERNEL_OK")
</pallas_src>

<mosaic_0001>
module attributes {stable_mosaic.version = 11 : i64} {
  func.func @_stage2_kernel(%arg0: i32, %arg1: memref<16x128xbf16, #tpu.memory_space<vmem>>, %arg2: memref<1x128xf32, #tpu.memory_space<vmem>>, %arg3: memref<1x128xf32, #tpu.memory_space<vmem>>, %arg4: memref<128x512xbf16, #tpu.memory_space<vmem>>, %arg5: memref<1x512xf32, #tpu.memory_space<vmem>>, %arg6: memref<16x512xf32, #tpu.memory_space<vmem>>) attributes {dimension_semantics = [#tpu.dimension_semantics<parallel>], iteration_bounds = array<i64: 4>, scalar_prefetch = 0 : i64, scratch_operands = 0 : i64, tpu.core_type = #tpu.core_type<tc>, window_params = [{transform_indices = @transform_0, window_bounds = array<i64: 16, 128>}, {pipeline_mode = #tpu.pipeline_mode<synchronous>, transform_indices = @transform_1, window_bounds = array<i64: 1, 128>}, {pipeline_mode = #tpu.pipeline_mode<synchronous>, transform_indices = @transform_2, window_bounds = array<i64: 1, 128>}, {pipeline_mode = #tpu.pipeline_mode<synchronous>, transform_indices = @transform_3, window_bounds = array<i64: 128, 512>}, {pipeline_mode = #tpu.pipeline_mode<synchronous>, transform_indices = @transform_4, window_bounds = array<i64: 1, 512>}, {transform_indices = @transform_5, window_bounds = array<i64: 16, 512>}]} {
    %c0 = arith.constant 0 : index
    %c0_0 = arith.constant 0 : index
    %0 = vector.load %arg1[%c0, %c0_0] : memref<16x128xbf16, #tpu.memory_space<vmem>>, vector<16x128xbf16>
    %1 = arith.extf %0 : vector<16x128xbf16> to vector<16x128xf32>
    %c0_1 = arith.constant 0 : index
    %c0_2 = arith.constant 0 : index
    %2 = vector.load %arg2[%c0_1, %c0_2] : memref<1x128xf32, #tpu.memory_space<vmem>>, vector<1x128xf32>
    %3 = vector.broadcast %2 : vector<1x128xf32> to vector<16x128xf32>
    %4 = arith.mulf %1, %3 : vector<16x128xf32>
    %c0_3 = arith.constant 0 : index
    %c0_4 = arith.constant 0 : index
    %5 = vector.load %arg3[%c0_3, %c0_4] : memref<1x128xf32, #tpu.memory_space<vmem>>, vector<1x128xf32>
    %6 = vector.broadcast %5 : vector<1x128xf32> to vector<16x128xf32>
    %7 = arith.addf %4, %6 : vector<16x128xf32>
    %cst = arith.constant 0.000000e+00 : f32
    %8 = vector.broadcast %cst : f32 to vector<16x128xf32>
    %9 = arith.maximumf %7, %8 : vector<16x128xf32>
    %10 = arith.truncf %9 : vector<16x128xf32> to vector<16x128xbf16>
    %c0_5 = arith.constant 0 : index
    %c0_6 = arith.constant 0 : index
    %11 = vector.load %arg4[%c0_5, %c0_6] : memref<128x512xbf16, #tpu.memory_space<vmem>>, vector<128x512xbf16>
    %cst_7 = arith.constant dense<0.000000e+00> : vector<16x512xf32>
    %12 = tpu.matmul %10, %11, %cst_7 {dimension_numbers = #tpu.dot_dimension_numbers<[1], [0], [0], [1], [0, 0, 1, 1], [], []>} : vector<16x128xbf16>, vector<128x512xbf16>, vector<16x512xf32> -> vector<16x512xf32>
    %c0_8 = arith.constant 0 : index
    %c0_9 = arith.constant 0 : index
    %13 = vector.load %arg5[%c0_8, %c0_9] : memref<1x512xf32, #tpu.memory_space<vmem>>, vector<1x512xf32>
    %14 = vector.broadcast %13 : vector<1x512xf32> to vector<16x512xf32>
    %15 = arith.addf %12, %14 : vector<16x512xf32>
    %c0_10 = arith.constant 0 : index
    %c0_11 = arith.constant 0 : index
    %16 = vector.load %arg6[%c0_10, %c0_11] : memref<16x512xf32, #tpu.memory_space<vmem>>, vector<16x512xf32>
    tpu.vector_store %arg6[%c0_10, %c0_11], %15 {strides = array<i32>} : memref<16x512xf32, #tpu.memory_space<vmem>>, vector<16x512xf32>,
    return
  }
  func.func @transform_0(%arg0: i32) -> (i32, i32) {
    %c0_i32 = arith.constant 0 : i32
    %c0_i32_0 = arith.constant 0 : i32
    return %arg0, %c0_i32 : i32, i32
  }
  func.func @transform_1(%arg0: i32) -> (i32, i32) {
    %c0_i32 = arith.constant 0 : i32
    %c0_i32_0 = arith.constant 0 : i32
    %c0_i32_1 = arith.constant 0 : i32
    return %c0_i32, %c0_i32_0 : i32, i32
  }
  func.func @transform_2(%arg0: i32) -> (i32, i32) {
    %c0_i32 = arith.constant 0 : i32
    %c0_i32_0 = arith.constant 0 : i32
    %c0_i32_1 = arith.constant 0 : i32
    return %c0_i32, %c0_i32_0 : i32, i32
  }
  func.func @transform_3(%arg0: i32) -> (i32, i32) {
    %c0_i32 = arith.constant 0 : i32
    %c0_i32_0 = arith.constant 0 : i32
    %c0_i32_1 = arith.constant 0 : i32
    return %c0_i32, %c0_i32_0 : i32, i32
  }
  func.func @transform_4(%arg0: i32) -> (i32, i32) {
    %c0_i32 = arith.constant 0 : i32
    %c0_i32_0 = arith.constant 0 : i32
    %c0_i32_1 = arith.constant 0 : i32
    return %c0_i32, %c0_i32_0 : i32, i32
  }
  func.func @transform_5(%arg0: i32) -> (i32, i32) {
    %c0_i32 = arith.constant 0 : i32
    %c0_i32_0 = arith.constant 0 : i32
    return %arg0, %c0_i32 : i32, i32
  }
}

module attributes {stable_mosaic.version = 11 : i64} {
  func.func @_stage1_kernel(%arg0: i32, %arg1: memref<16x512xf32, #tpu.memory_space<vmem>>, %arg2: memref<512x128xbf16, #tpu.memory_space<vmem>>, %arg3: memref<16x128xbf16, #tpu.memory_space<vmem>>, %arg4: memref<1x1x128xf32, #tpu.memory_space<vmem>>, %arg5: memref<1x1x128xf32, #tpu.memory_space<vmem>>) attributes {dimension_semantics = [#tpu.dimension_semantics<parallel>], iteration_bounds = array<i64: 4>, scalar_prefetch = 0 : i64, scratch_operands = 0 : i64, tpu.core_type = #tpu.core_type<tc>, window_params = [{transform_indices = @transform_0, window_bounds = array<i64: 16, 512>}, {pipeline_mode = #tpu.pipeline_mode<synchronous>, transform_indices = @transform_1, window_bounds = array<i64: 512, 128>}, {transform_indices = @transform_2, window_bounds = array<i64: 16, 128>}, {transform_indices = @transform_3, window_bounds = array<i64: 1, 1, 128>}, {transform_indices = @transform_4, window_bounds = array<i64: 1, 1, 128>}]} {
    %c0 = arith.constant 0 : index
    %c0_0 = arith.constant 0 : index
    %0 = vector.load %arg1[%c0, %c0_0] : memref<16x512xf32, #tpu.memory_space<vmem>>, vector<16x512xf32>
    %1 = arith.truncf %0 : vector<16x512xf32> to vector<16x512xbf16>
    %c0_1 = arith.constant 0 : index
    %c0_2 = arith.constant 0 : index
    %2 = vector.load %arg2[%c0_1, %c0_2] : memref<512x128xbf16, #tpu.memory_space<vmem>>, vector<512x128xbf16>
    %cst = arith.constant dense<0.000000e+00> : vector<16x128xf32>
    %3 = tpu.matmul %1, %2, %cst {dimension_numbers = #tpu.dot_dimension_numbers<[1], [0], [0], [1], [0, 0, 1, 1], [], []>} : vector<16x512xbf16>, vector<512x128xbf16>, vector<16x128xf32> -> vector<16x128xf32>
    %cst_3 = arith.constant dense<0.000000e+00> : vector<128xf32>
    %4 = vector.multi_reduction <add>, %3, %cst_3 [0] : vector<16x128xf32> to vector<128xf32>
    %5 = vector.shape_cast %4 : vector<128xf32> to vector<1x128xf32>
    %6 = vector.shape_cast %5 : vector<1x128xf32> to vector<1x1x128xf32>
    %c0_4 = arith.constant 0 : index
    %c0_5 = arith.constant 0 : index
    %c0_6 = arith.constant 0 : index
    %7 = vector.load %arg4[%c0_4, %c0_5, %c0_6] : memref<1x1x128xf32, #tpu.memory_space<vmem>>, vector<1x1x128xf32>
    tpu.vector_store %arg4[%c0_4, %c0_5, %c0_6], %6 {strides = array<i32>} : memref<1x1x128xf32, #tpu.memory_space<vmem>>, vector<1x1x128xf32>,
    %8 = arith.mulf %3, %3 : vector<16x128xf32>
    %cst_7 = arith.constant dense<0.000000e+00> : vector<128xf32>
    %9 = vector.multi_reduction <add>, %8, %cst_7 [0] : vector<16x128xf32> to vector<128xf32>
    %10 = vector.shape_cast %9 : vector<128xf32> to vector<1x128xf32>
    %11 = vector.shape_cast %10 : vector<1x128xf32> to vector<1x1x128xf32>
    %c0_8 = arith.constant 0 : index
    %c0_9 = arith.constant 0 : index
    %c0_10 = arith.constant 0 : index
    %12 = vector.load %arg5[%c0_8, %c0_9, %c0_10] : memref<1x1x128xf32, #tpu.memory_space<vmem>>, vector<1x1x128xf32>
    tpu.vector_store %arg5[%c0_8, %c0_9, %c0_10], %11 {strides = array<i32>} : memref<1x1x128xf32, #tpu.memory_space<vmem>>, vector<1x1x128xf32>,
    %13 = arith.truncf %3 : vector<16x128xf32> to vector<16x128xbf16>
    %c0_11 = arith.constant 0 : index
    %c0_12 = arith.constant 0 : index
    %14 = vector.load %arg3[%c0_11, %c0_12] : memref<16x128xbf16, #tpu.memory_space<vmem>>, vector<16x128xbf16>
    tpu.vector_store %arg3[%c0_11, %c0_12], %13 {strides = array<i32>} : memref<16x128xbf16, #tpu.memory_space<vmem>>, vector<16x128xbf16>,
    return
  }
  func.func @transform_0(%arg0: i32) -> (i32, i32) {
    %c0_i32 = arith.constant 0 : i32
    %c0_i32_0 = arith.constant 0 : i32
    return %arg0, %c0_i32 : i32, i32
  }
  func.func @transform_1(%arg0: i32) -> (i32, i32) {
    %c0_i32 = arith.constant 0 : i32
    %c0_i32_0 = arith.constant 0 : i32
    %c0_i32_1 = arith.constant 0 : i32
    return %c0_i32, %c0_i32_0 : i32, i32
  }
  func.func @transform_2(%arg0: i32) -> (i32, i32) {
    %c0_i32 = arith.constant 0 : i32
    %c0_i32_0 = arith.constant 0 : i32
    return %arg0, %c0_i32 : i32, i32
  }
  func.func @transform_3(%arg0: i32) -> (i32, i32, i32) {
    %c0_i32 = arith.constant 0 : i32
    %c0_i32_0 = arith.constant 0 : i32
    %c0_i32_1 = arith.constant 0 : i32
    return %arg0, %c0_i32, %c0_i32_0 : i32, i32, i32
  }
  func.func @transform_4(%arg0: i32) -> (i32, i32, i32) {
    %c0_i32 = arith.constant 0 : i32
    %c0_i32_0 = arith.constant 0 : i32
    %c0_i32_1 = arith.constant 0 : i32
    return %arg0, %c0_i32, %c0_i32_0 : i32, i32, i32
  }
}

module attributes {stable_mosaic.version = 11 : i64} {
  func.func @_stage2_kernel(%arg0: i32, %arg1: memref<16x128xbf16, #tpu.memory_space<vmem>>, %arg2: memref<1x128xf32, #tpu.memory_space<vmem>>, %arg3: memref<1x128xf32, #tpu.memory_space<vmem>>, %arg4: memref<128x512xbf16, #tpu.memory_space<vmem>>, %arg5: memref<1x512xf32, #tpu.memory_space<vmem>>, %arg6: memref<16x512xf32, #tpu.memory_space<vmem>>) attributes {dimension_semantics = [#tpu.dimension_semantics<parallel>], iteration_bounds = array<i64: 4>, scalar_prefetch = 0 : i64, scratch_operands = 0 : i64, tpu.core_type = #tpu.core_type<tc>, window_params = [{transform_indices = @transform_0, window_bounds = array<i64: 16, 128>}, {pipeline_mode = #tpu.pipeline_mode<synchronous>, transform_indices = @transform_1, window_bounds = array<i64: 1, 128>}, {pipeline_mode = #tpu.pipeline_mode<synchronous>, transform_indices = @transform_2, window_bounds = array<i64: 1, 128>}, {pipeline_mode = #tpu.pipeline_mode<synchronous>, transform_indices = @transform_3, window_bounds = array<i64: 128, 512>}, {pipeline_mode = #tpu.pipeline_mode<synchronous>, transform_indices = @transform_4, window_bounds = array<i64: 1, 512>}, {transform_indices = @transform_5, window_bounds = array<i64: 16, 512>}]} {
    %c0 = arith.constant 0 : index
    %c0_0 = arith.constant 0 : index
    %0 = vector.load %arg1[%c0, %c0_0] : memref<16x128xbf16, #tpu.memory_space<vmem>>, vector<16x128xbf16>
    %1 = arith.extf %0 : vector<16x128xbf16> to vector<16x128xf32>
    %c0_1 = arith.constant 0 : index
    %c0_2 = arith.constant 0 : index
    %2 = vector.load %arg2[%c0_1, %c0_2] : memref<1x128xf32, #tpu.memory_space<vmem>>, vector<1x128xf32>
    %3 = vector.broadcast %2 : vector<1x128xf32> to vector<16x128xf32>
    %4 = arith.mulf %1, %3 : vector<16x128xf32>
    %c0_3 = arith.constant 0 : index
    %c0_4 = arith.constant 0 : index
    %5 = vector.load %arg3[%c0_3, %c0_4] : memref<1x128xf32, #tpu.memory_space<vmem>>, vector<1x128xf32>
    %6 = vector.broadcast %5 : vector<1x128xf32> to vector<16x128xf32>
    %7 = arith.addf %4, %6 : vector<16x128xf32>
    %cst = arith.constant 0.000000e+00 : f32
    %8 = vector.broadcast %cst : f32 to vector<16x128xf32>
    %9 = arith.maximumf %7, %8 : vector<16x128xf32>
    %10 = arith.truncf %9 : vector<16x128xf32> to vector<16x128xbf16>
    %c0_5 = arith.constant 0 : index
    %c0_6 = arith.constant 0 : index
    %11 = vector.load %arg4[%c0_5, %c0_6] : memref<128x512xbf16, #tpu.memory_space<vmem>>, vector<128x512xbf16>
    %cst_7 = arith.constant dense<0.000000e+00> : vector<16x512xf32>
    %12 = tpu.matmul %10, %11, %cst_7 {dimension_numbers = #tpu.dot_dimension_numbers<[1], [0], [0], [1], [0, 0, 1, 1], [], []>} : vector<16x128xbf16>, vector<128x512xbf16>, vector<16x512xf32> -> vector<16x512xf32>
    %c0_8 = arith.constant 0 : index
    %c0_9 = arith.constant 0 : index
    %13 = vector.load %arg5[%c0_8, %c0_9] : memref<1x512xf32, #tpu.memory_space<vmem>>, vector<1x512xf32>
    %14 = vector.broadcast %13 : vector<1x512xf32> to vector<16x512xf32>
    %15 = arith.addf %12, %14 : vector<16x512xf32>
    %c0_10 = arith.constant 0 : index
    %c0_11 = arith.constant 0 : index
    %16 = vector.load %arg6[%c0_10, %c0_11] : memref<16x512xf32, #tpu.memory_space<vmem>>, vector<16x512xf32>
    tpu.vector_store %arg6[%c0_10, %c0_11], %15 {strides = array<i32>} : memref<16x512xf32, #tpu.memory_space<vmem>>, vector<16x512xf32>,
    return
  }
  func.func @transform_0(%arg0: i32) -> (i32, i32) {
    %c0_i32 = arith.constant 0 : i32
    %c0_i32_0 = arith.constant 0 : i32
    return %arg0, %c0_i32 : i32, i32
  }
  func.func @transform_1(%arg0: i32) -> (i32, i32) {
    %c0_i32 = arith.constant 0 : i32
    %c0_i32_0 = arith.constant 0 : i32
    %c0_i32_1 = arith.constant 0 : i32
    return %c0_i32, %c0_i32_0 : i32, i32
  }
  func.func @transform_2(%arg0: i32) -> (i32, i32) {
    %c0_i32 = arith.constant 0 : i32
    %c0_i32_0 = arith.constant 0 : i32
    %c0_i32_1 = arith.constant 0 : i32
    return %c0_i32, %c0_i32_0 : i32, i32
  }
  func.func @transform_3(%arg0: i32) -> (i32, i32) {
    %c0_i32 = arith.constant 0 : i32
    %c0_i32_0 = arith.constant 0 : i32
    %c0_i32_1 = arith.constant 0 : i32
    return %c0_i32, %c0_i32_0 : i32, i32
  }
  func.func @transform_4(%arg0: i32) -> (i32, i32) {
    %c0_i32 = arith.constant 0 : i32
    %c0_i32_0 = arith.constant 0 : i32
    %c0_i32_1 = arith.constant 0 : i32
    return %c0_i32, %c0_i32_0 : i32, i32
  }
  func.func @transform_5(%arg0: i32) -> (i32, i32) {
    %c0_i32 = arith.constant 0 : i32
    %c0_i32_0 = arith.constant 0 : i32
    return %arg0, %c0_i32 : i32, i32
  }
}

module attributes {stable_mosaic.version = 11 : i64} {
  func.func @_stage1_kernel(%arg0: i32, %arg1: memref<16x512xf32, #tpu.memory_space<vmem>>, %arg2: memref<512x128xbf16, #tpu.memory_space<vmem>>, %arg3: memref<16x128xbf16, #tpu.memory_space<vmem>>, %arg4: memref<1x1x128xf32, #tpu.memory_space<vmem>>, %arg5: memref<1x1x128xf32, #tpu.memory_space<vmem>>) attributes {dimension_semantics = [#tpu.dimension_semantics<parallel>], iteration_bounds = array<i64: 4>, scalar_prefetch = 0 : i64, scratch_operands = 0 : i64, tpu.core_type = #tpu.core_type<tc>, window_params = [{transform_indices = @transform_0, window_bounds = array<i64: 16, 512>}, {pipeline_mode = #tpu.pipeline_mode<synchronous>, transform_indices = @transform_1, window_bounds = array<i64: 512, 128>}, {transform_indices = @transform_2, window_bounds = array<i64: 16, 128>}, {transform_indices = @transform_3, window_bounds = array<i64: 1, 1, 128>}, {transform_indices = @transform_4, window_bounds = array<i64: 1, 1, 128>}]} {
    %c0 = arith.constant 0 : index
    %c0_0 = arith.constant 0 : index
    %0 = vector.load %arg1[%c0, %c0_0] : memref<16x512xf32, #tpu.memory_space<vmem>>, vector<16x512xf32>
    %1 = arith.truncf %0 : vector<16x512xf32> to vector<16x512xbf16>
    %c0_1 = arith.constant 0 : index
    %c0_2 = arith.constant 0 : index
    %2 = vector.load %arg2[%c0_1, %c0_2] : memref<512x128xbf16, #tpu.memory_space<vmem>>, vector<512x128xbf16>
    %cst = arith.constant dense<0.000000e+00> : vector<16x128xf32>
    %3 = tpu.matmul %1, %2, %cst {dimension_numbers = #tpu.dot_dimension_numbers<[1], [0], [0], [1], [0, 0, 1, 1], [], []>} : vector<16x512xbf16>, vector<512x128xbf16>, vector<16x128xf32> -> vector<16x128xf32>
    %cst_3 = arith.constant dense<0.000000e+00> : vector<128xf32>
    %4 = vector.multi_reduction <add>, %3, %cst_3 [0] : vector<16x128xf32> to vector<128xf32>
    %5 = vector.shape_cast %4 : vector<128xf32> to vector<1x128xf32>
    %6 = vector.shape_cast %5 : vector<1x128xf32> to vector<1x1x128xf32>
    %c0_4 = arith.constant 0 : index
    %c0_5 = arith.constant 0 : index
    %c0_6 = arith.constant 0 : index
    %7 = vector.load %arg4[%c0_4, %c0_5, %c0_6] : memref<1x1x128xf32, #tpu.memory_space<vmem>>, vector<1x1x128xf32>
    tpu.vector_store %arg4[%c0_4, %c0_5, %c0_6], %6 {strides = array<i32>} : memref<1x1x128xf32, #tpu.memory_space<vmem>>, vector<1x1x128xf32>,
    %8 = arith.mulf %3, %3 : vector<16x128xf32>
    %cst_7 = arith.constant dense<0.000000e+00> : vector<128xf32>
    %9 = vector.multi_reduction <add>, %8, %cst_7 [0] : vector<16x128xf32> to vector<128xf32>
    %10 = vector.shape_cast %9 : vector<128xf32> to vector<1x128xf32>
    %11 = vector.shape_cast %10 : vector<1x128xf32> to vector<1x1x128xf32>
    %c0_8 = arith.constant 0 : index
    %c0_9 = arith.constant 0 : index
    %c0_10 = arith.constant 0 : index
    %12 = vector.load %arg5[%c0_8, %c0_9, %c0_10] : memref<1x1x128xf32, #tpu.memory_space<vmem>>, vector<1x1x128xf32>
    tpu.vector_store %arg5[%c0_8, %c0_9, %c0_10], %11 {strides = array<i32>} : memref<1x1x128xf32, #tpu.memory_space<vmem>>, vector<1x1x128xf32>,
    %13 = arith.truncf %3 : vector<16x128xf32> to vector<16x128xbf16>
    %c0_11 = arith.constant 0 : index
    %c0_12 = arith.constant 0 : index
    %14 = vector.load %arg3[%c0_11, %c0_12] : memref<16x128xbf16, #tpu.memory_space<vmem>>, vector<16x128xbf16>
    tpu.vector_store %arg3[%c0_11, %c0_12], %13 {strides = array<i32>} : memref<16x128xbf16, #tpu.memory_space<vmem>>, vector<16x128xbf16>,
    return
  }
  func.func @transform_0(%arg0: i32) -> (i32, i32) {
    %c0_i32 = arith.constant 0 : i32
    %c0_i32_0 = arith.constant 0 : i32
    return %arg0, %c0_i32 : i32, i32
  }
  func.func @transform_1(%arg0: i32) -> (i32, i32) {
    %c0_i32 = arith.constant 0 : i32
    %c0_i32_0 = arith.constant 0 : i32
    %c0_i32_1 = arith.constant 0 : i32
    return %c0_i32, %c0_i32_0 : i32, i32
  }
  func.func @transform_2(%arg0: i32) -> (i32, i32) {
    %c0_i32 = arith.constant 0 : i32
    %c0_i32_0 = arith.constant 0 : i32
    return %arg0, %c0_i32 : i32, i32
  }
  func.func @transform_3(%arg0: i32) -> (i32, i32, i32) {
    %c0_i32 = arith.constant 0 : i32
    %c0_i32_0 = arith.constant 0 : i32
    %c0_i32_1 = arith.constant 0 : i32
    return %arg0, %c0_i32, %c0_i32_0 : i32, i32, i32
  }
  func.func @transform_4(%arg0: i32) -> (i32, i32, i32) {
    %c0_i32 = arith.constant 0 : i32
    %c0_i32_0 = arith.constant 0 : i32
    %c0_i32_1 = arith.constant 0 : i32
    return %arg0, %c0_i32, %c0_i32_0 : i32, i32, i32
  }
}

</mosaic_0001>

<llo_original>
// kernel: prediction_mlp.3
$region0: #{prediction_mlp.3}
  #allocation0 [shape = 'u32[]', space=smem, size = 0x4, offset = 0x4, fixed_abs, tag = 'smem constant byte address 0x4 - core index']
  #allocation1 [shape = 'u32[144,128]{1,0:T(1,128)}', space=vmem, size = 0x12000, scoped, tag = 'internal scratch']
  %s0 = inlined_call_operand.vmem [shape: bf16[64,128], index: 0, kind: input, shape index: {}]
  %s1 = inlined_call_operand.vmem [shape: f32[1,128], index: 1, kind: input, shape index: {}]
  %s2 = inlined_call_operand.vmem [shape: f32[1,128], index: 2, kind: input, shape index: {}]
  %s3 = inlined_call_operand.vmem [shape: bf16[128,512], index: 3, kind: input, shape index: {}]
  %s4 = inlined_call_operand.vmem [shape: f32[1,512], index: 4, kind: input, shape index: {}]
  %s5 = inlined_call_operand.hbm [shape: f32[64,512], index: 5, kind: output, shape index: {}]
  %s6 = sld [smem:[#allocation0]]
  $region53: #{prediction_mlp.3} parent=0
    _
  %s8 = ssub.s32 1, %s6
  %s9 = scalar_select 0, %s8, %s6
  $region1: #{prediction_mlp.3} parent=0
    #allocation2 [shape = 'u8[65536]{0}', space=vmem, size = 0x10000, scoped, tag = 'output window, operand 0']
    #allocation3 [shape = 's32[2]{0}', space=sflag, size = 0x8, scoped, tag = 'scoped memory for prediction_mlp.3']
    %10 = vsyncpa [#allocation3], 0
    %s11 = scalar_lea.sflag [#allocation3], 1
    %12 = vsyncpa %s11, 0
    loop: start=0, step=1, limit=6
    $region2: #{prediction_mlp.3} parent=1 // loop_pre_header
      _
    $region3: #{prediction_mlp.3} parent=1 // loop_header
      %s14 = sphi 0, %s18
      %p15 = scmp.ge.s32.totalorder %s14, 6
      %s24 = sphi 0, %s26
      %s27 = sphi 0, %s24
      %s28 = sphi 0, %s27
      %s44 = sphi 0, %s28
      %s48 = sphi 0, %s48
      %s50 = sphi 0, %s48
      %s51 = sphi 0, %s50
      %s65 = sphi 0, %s51
      %s69 = sphi 0, %s69
      %s71 = sphi 0, %s69
      %s72 = sphi 0, %s71
      %s86 = sphi 0, %s72
      %s90 = sphi 0, %s90
      %s92 = sphi 0, %s90
      %s93 = sphi 0, %s92
      %s107 = sphi 0, %s93
      %s111 = sphi 0, %s111
      %s113 = sphi 0, %s111
      %s114 = sphi 0, %s113
      %s128 = sphi 0, %s114
      %s134 = sphi 0, %s136
      %s137 = sphi 0, %s134
      %s138 = sphi 0, %s137
      %s154 = sphi 0, %s138
    $region4: #{prediction_mlp.3} parent=1 // loop_header_branch
      %17 = sbr.rel (%p15) target = $region8
    $region5: #{prediction_mlp.3} parent=1 // loop_body
      %s19 = ssub.s32 %s14, 1
      %s20 = ssub.s32 %s14, 2
      %s21 = sadd.s32 %s14, 1
      %s22 = ssub.s32 %s14, %s21
      %p23 = scmp.eq.s32.totalorder %s22, 0
      %s25 = sadd.s32 %s24, 1
      %s26 = scalar_select %p23, %s24, %s25
      %p29 = pneg %p23
      %p30 = scmp.eq.s32.totalorder %s14, 3
      %p31 = por %p29, %p30
      %p32 = scmp.ne.s32.totalorder %s24, %s27
      %p33 = scmp.eq.s32.totalorder %s14, 0
      %p34 = por %p32, %p33
      %p35 = scmp.ne.s32.totalorder %s24, %s27
      %p36 = scmp.eq.s32.totalorder %s19, 3
      %p37 = por %p35, %p36
      %p38 = scmp.ne.s32.totalorder %s27, %s28
      %p39 = scmp.eq.s32.totalorder %s19, 0
      %p40 = por %p38, %p39
      %p41 = scmp.ne.s32.totalorder %s27, %s28
      %p42 = scmp.eq.s32.totalorder %s20, 3
      %p43 = por %p41, %p42
      %p45 = scmp.ne.s32.totalorder %s28, %s44
      %p46 = scmp.eq.s32.totalorder %s20, 0
      %p47 = por %p45, %p46
      %s49 = sadd.s32 %s48, 1
      %p52 = scmp.eq.s32.totalorder %s14, 3
      %p53 = scmp.ne.s32.totalorder %s48, %s50
      %p54 = scmp.eq.s32.totalorder %s14, 0
      %p55 = por %p53, %p54
      %p56 = scmp.ne.s32.totalorder %s48, %s50
      %p57 = scmp.eq.s32.totalorder %s19, 3
      %p58 = por %p56, %p57
      %p59 = scmp.ne.s32.totalorder %s50, %s51
      %p60 = scmp.eq.s32.totalorder %s19, 0
      %p61 = por %p59, %p60
      %p62 = scmp.ne.s32.totalorder %s50, %s51
      %p63 = scmp.eq.s32.totalorder %s20, 3
      %p64 = por %p62, %p63
      %p66 = scmp.ne.s32.totalorder %s51, %s65
      %p67 = scmp.eq.s32.totalorder %s20, 0
      %p68 = por %p66, %p67
      %s70 = sadd.s32 %s69, 1
      %p73 = scmp.eq.s32.totalorder %s14, 3
      %p74 = scmp.ne.s32.totalorder %s69, %s71
      %p75 = scmp.eq.s32.totalorder %s14, 0
      %p76 = por %p74, %p75
      %p77 = scmp.ne.s32.totalorder %s69, %s71
      %p78 = scmp.eq.s32.totalorder %s19, 3
      %p79 = por %p77, %p78
      %p80 = scmp.ne.s32.totalorder %s71, %s72
      %p81 = scmp.eq.s32.totalorder %s19, 0
      %p82 = por %p80, %p81
      %p83 = scmp.ne.s32.totalorder %s71, %s72
      %p84 = scmp.eq.s32.totalorder %s20, 3
      %p85 = por %p83, %p84
      %p87 = scmp.ne.s32.totalorder %s72, %s86
      %p88 = scmp.eq.s32.totalorder %s20, 0
      %p89 = por %p87, %p88
      %s91 = sadd.s32 %s90, 1
      %p94 = scmp.eq.s32.totalorder %s14, 3
      %p95 = scmp.ne.s32.totalorder %s90, %s92
      %p96 = scmp.eq.s32.totalorder %s14, 0
      %p97 = por %p95, %p96
      %p98 = scmp.ne.s32.totalorder %s90, %s92
      %p99 = scmp.eq.s32.totalorder %s19, 3
      %p100 = por %p98, %p99
      %p101 = scmp.ne.s32.totalorder %s92, %s93
      %p102 = scmp.eq.s32.totalorder %s19, 0
      %p103 = por %p101, %p102
      %p104 = scmp.ne.s32.totalorder %s92, %s93
      %p105 = scmp.eq.s32.totalorder %s20, 3
      %p106 = por %p104, %p105
      %p108 = scmp.ne.s32.totalorder %s93, %s107
      %p109 = scmp.eq.s32.totalorder %s20, 0
      %p110 = por %p108, %p109
      %s112 = sadd.s32 %s111, 1
      %p115 = scmp.eq.s32.totalorder %s14, 3
      %p116 = scmp.ne.s32.totalorder %s111, %s113
      %p117 = scmp.eq.s32.totalorder %s14, 0
      %p118 = por %p116, %p117
      %p119 = scmp.ne.s32.totalorder %s111, %s113
      %p120 = scmp.eq.s32.totalorder %s19, 3
      %p121 = por %p119, %p120
      %p122 = scmp.ne.s32.totalorder %s113, %s114
      %p123 = scmp.eq.s32.totalorder %s19, 0
      %p124 = por %p122, %p123
      %p125 = scmp.ne.s32.totalorder %s113, %s114
      %p126 = scmp.eq.s32.totalorder %s20, 3
      %p127 = por %p125, %p126
      %p129 = scmp.ne.s32.totalorder %s114, %s128
      %p130 = scmp.eq.s32.totalorder %s20, 0
      %p131 = por %p129, %p130
      %s132 = ssub.s32 %s14, %s21
      %p133 = scmp.eq.s32.totalorder %s132, 0
      %s135 = sadd.s32 %s134, 1
      %s136 = scalar_select %p133, %s134, %s135
      %p139 = pneg %p133
      %p140 = scmp.eq.s32.totalorder %s14, 3
      %p141 = por %p139, %p140
      %p142 = scmp.ne.s32.totalorder %s134, %s137
      %p143 = scmp.eq.s32.totalorder %s14, 0
      %p144 = por %p142, %p143
      %p145 = scmp.ne.s32.totalorder %s134, %s137
      %p146 = scmp.eq.s32.totalorder %s19, 3
      %p147 = por %p145, %p146
      %p148 = scmp.ne.s32.totalorder %s137, %s138
      %p149 = scmp.eq.s32.totalorder %s19, 0
      %p150 = por %p148, %p149
      %p151 = scmp.ne.s32.totalorder %s137, %s138
      %p152 = scmp.eq.s32.totalorder %s20, 3
      %p153 = por %p151, %p152
      %p155 = scmp.ne.s32.totalorder %s138, %s154
      %p156 = scmp.eq.s32.totalorder %s20, 0
      %p157 = por %p155, %p156
      %p158 = scmp.le.s32.totalorder 1, %s14
      %p159 = scmp.lt.s32.totalorder %s14, 5
      %p160 = pnand %p158, %p159
      %p161 = pneg %p160
      // Predicated region
      $region9: #{prediction_mlp.3} parent=5 // pred_check
        _
      $region10: #{prediction_mlp.3} parent=5 // pred_check_branch
        %163 = sbr.rel (%p160) target = $region12
      $region11: #{prediction_mlp.3} parent=5 // pred_region
        %s164 = ssub.s32 %s14, 1
        // Predicated region
        $region13: #{prediction_mlp.3} parent=11 // pred_check
          %p165 = pneg %p61
        $region14: #{prediction_mlp.3} parent=11 // pred_check_branch
          %167 = sbr.rel (%p165) target = $region16
        $region15: #{prediction_mlp.3} parent=11 // pred_region
          _
        $region16: #{prediction_mlp.3} parent=11 // pred_fallthru
          _
        // Predicated region
        $region17: #{prediction_mlp.3} parent=11 // pred_check
          %p168 = pneg %p82
        $region18: #{prediction_mlp.3} parent=11 // pred_check_branch
          %170 = sbr.rel (%p168) target = $region20
        $region19: #{prediction_mlp.3} parent=11 // pred_region
          _
        $region20: #{prediction_mlp.3} parent=11 // pred_fallthru
          _
        // Predicated region
        $region21: #{prediction_mlp.3} parent=11 // pred_check
          %p171 = pneg %p103
        $region22: #{prediction_mlp.3} parent=11 // pred_check_branch
          %173 = sbr.rel (%p171) target = $region24
        $region23: #{prediction_mlp.3} parent=11 // pred_region
          _
        $region24: #{prediction_mlp.3} parent=11 // pred_fallthru
          _
        // Predicated region
        $region25: #{prediction_mlp.3} parent=11 // pred_check
          %p174 = pneg %p124
        $region26: #{prediction_mlp.3} parent=11 // pred_check_branch
          %176 = sbr.rel (%p174) target = $region28
        $region27: #{prediction_mlp.3} parent=11 // pred_region
          _
        $region28: #{prediction_mlp.3} parent=11 // pred_fallthru
          _
      $region12: #{prediction_mlp.3} parent=5 // pred_fallthru
        _
      %p177 = scmp.lt.s32.totalorder %s14, 4
      // Predicated region
      $region29: #{prediction_mlp.3} parent=5 // pred_check
        %p178 = pneg %p177
      $region30: #{prediction_mlp.3} parent=5 // pred_check_branch
        %180 = sbr.rel (%p178) target = $region32
      $region31: #{prediction_mlp.3} parent=5 // pred_region
        // Predicated region
        $region33: #{prediction_mlp.3} parent=31 // pred_check
          %p181 = pneg %p34
        $region34: #{prediction_mlp.3} parent=31 // pred_check_branch
          %183 = sbr.rel (%p181) target = $region36
        $region35: #{prediction_mlp.3} parent=31 // pred_region
          %s184 = smul.u32 2, %s14
          %p185 = scmp.lt.s32.totalorder %s184, 7
          %s186 = scalar_select %p185, %s184, 7
          %s187 = smul.addr %s186, 4
          %s188 = scalar_lea.vmem %s0, %s187
          %s189 = smul.u32 2, %s14
        $region36: #{prediction_mlp.3} parent=31 // pred_fallthru
          _
      $region32: #{prediction_mlp.3} parent=5 // pred_fallthru
        _
      %p190 = scmp.le.s32.totalorder 1, %s14
      %p191 = scmp.lt.s32.totalorder %s14, 5
      %p192 = pnand %p190, %p191
      %p193 = pneg %p192
      // Predicated region
      $region37: #{prediction_mlp.3} parent=5 // pred_check
        _
      $region38: #{prediction_mlp.3} parent=5 // pred_check_branch
        %195 = sbr.rel (%p192) target = $region40
      $region39: #{prediction_mlp.3} parent=5 // pred_region
        %s196 = ssub.s32 %s14, 1
        %s197 = smul.u32 2, %s19
        %p198 = scmp.lt.s32.totalorder %s197, 7
        %s199 = scalar_select %p198, %s197, 7
        %s200 = smul.addr %s199, 4
        %s201 = scalar_lea.vmem %s0, %s200
        %p202 = pneg %p40
        %p203 = pneg %p37
        %p204 = pneg %p61
        %p205 = pneg %p58
        %p206 = pneg %p82
        %p207 = pneg %p79
        %p208 = pneg %p103
        %p209 = pneg %p100
        %p210 = pneg %p124
        %p211 = pneg %p121
        %p212 = pneg %p150
        %p213 = pneg %p147
        %s214 = sand.u32 %s137, 1
        %s215 = scalar_lea.sflag [#allocation3], %s214
        %s216 = sand.u32 %s137, 1
        %s217 = smul.addr %s216, 64
        %s218 = scalar_lea.vmem [#allocation2], %s217
        %s219 = smul.u32 2, %s19
        %p220 = scmp.lt.s32.totalorder %s219, 7
        %s221 = scalar_select %p220, %s219, 7
        %s222 = smul.addr %s221, 4
        %s223 = scalar_lea.vmem %s0, %s222
        %s224 = smul.u32 2, %s19
        %s225 = smul.u32 2, %s19
        %v227 = vld [vmem:[%s223] sm:$0xf]
        %v228 = vld [vmem:[%s223 + $0x4] sm:$0xf]
        %v229 = vunpack.c.l.bf16 %v227
        %v230 = vunpack.c.l.bf16 %v228
        %v231 = vld [vmem:[%s1] sm:$0x1]
        %v233 = vlaneseq
        %v234 = vshrl.u32 %v233, 7
        %v235 = vsub.s32 0, %v234
        %v236 = vrot.slane %v231, %v235
        %v238 = vmul.f32 %v229, %v236
        %v239 = vmul.f32 %v230, %v236
        %v240 = vld [vmem:[%s2] sm:$0x1]
        %v242 = vlaneseq
        %v243 = vshrl.u32 %v242, 7
        %v244 = vsub.s32 0, %v243
        %v245 = vrot.slane %v240, %v244
        %v247 = vadd.f32 %v238, %v245
        %v248 = vadd.f32 %v239, %v245
        %v249 = vmax.f32 %v247, 0.0
        %v250 = vmax.f32 %v248, 0.0
        %v251 = vpack.c.bf16 %v250, %v249
        %v252 = vld [vmem:[%s3] sm:$0xff]
        %v253 = vld [vmem:[%s3 + $0x8] sm:$0xff]
        %v254 = vld [vmem:[%s3 + $0x10] sm:$0xff]
        %v255 = vld [vmem:[%s3 + $0x18] sm:$0xff]
        %v256 = vld [vmem:[%s3 + $0x20] sm:$0xff]
        %v257 = vld [vmem:[%s3 + $0x28] sm:$0xff]
        %v258 = vld [vmem:[%s3 + $0x30] sm:$0xff]
        %v259 = vld [vmem:[%s3 + $0x38] sm:$0xff]
        %v260 = vld [vmem:[%s3 + $0x40] sm:$0xff]
        %v261 = vld [vmem:[%s3 + $0x48] sm:$0xff]
        %v262 = vld [vmem:[%s3 + $0x50] sm:$0xff]
        %v263 = vld [vmem:[%s3 + $0x58] sm:$0xff]
        %v264 = vld [vmem:[%s3 + $0x60] sm:$0xff]
        %v265 = vld [vmem:[%s3 + $0x68] sm:$0xff]
        %v266 = vld [vmem:[%s3 + $0x70] sm:$0xff]
        %v267 = vld [vmem:[%s3 + $0x78] sm:$0xff]
        %v268 = vld [vmem:[%s3 + $0x80] sm:$0xff]
        %v269 = vld [vmem:[%s3 + $0x88] sm:$0xff]
        %v270 = vld [vmem:[%s3 + $0x90] sm:$0xff]
        %v271 = vld [vmem:[%s3 + $0x98] sm:$0xff]
        %v272 = vld [vmem:[%s3 + $0xa0] sm:$0xff]
        %v273 = vld [vmem:[%s3 + $0xa8] sm:$0xff]
        %v274 = vld [vmem:[%s3 + $0xb0] sm:$0xff]
        %v275 = vld [vmem:[%s3 + $0xb8] sm:$0xff]
        %v276 = vld [vmem:[%s3 + $0xc0] sm:$0xff]
        %v277 = vld [vmem:[%s3 + $0xc8] sm:$0xff]
        %v278 = vld [vmem:[%s3 + $0xd0] sm:$0xff]
        %v279 = vld [vmem:[%s3 + $0xd8] sm:$0xff]
        %v280 = vld [vmem:[%s3 + $0xe0] sm:$0xff]
        %v281 = vld [vmem:[%s3 + $0xe8] sm:$0xff]
        %v282 = vld [vmem:[%s3 + $0xf0] sm:$0xff]
        %v283 = vld [vmem:[%s3 + $0xf8] sm:$0xff]
        %v284 = vld [vmem:[%s4] sm:$0xf]
        %v286 = vlaneseq
        %v287 = vshrl.u32 %v286, 7
        %v288 = vsub.s32 0, %v287
        %v289 = vrot.slane %v284, %v288
        %v290 = vlaneseq
        %v291 = vshrl.u32 %v290, 7
        %v292 = vsub.s32 1, %v291
        %v293 = vrot.slane %v284, %v292
        %v294 = vlaneseq
        %v295 = vshrl.u32 %v294, 7
        %v296 = vsub.s32 2, %v295
        %v297 = vrot.slane %v284, %v296
        %v298 = vlaneseq
        %v299 = vshrl.u32 %v298, 7
        %v300 = vsub.s32 3, %v299
        %v301 = vrot.slane %v284, %v300
        %v338 = vunpack.c.l.b16 %v252
        %v339 = vunpack.c.h.b16 %v252
        %v340 = vunpack.c.l.b16 %v253
        %v341 = vunpack.c.h.b16 %v253
        %v342 = vunpack.c.l.b16 %v254
        %v343 = vunpack.c.h.b16 %v254
        %v344 = vunpack.c.l.b16 %v255
        %v345 = vunpack.c.h.b16 %v255
        %v346 = vunpack.c.l.b16 %v256
        %v347 = vunpack.c.h.b16 %v256
        %v348 = vunpack.c.l.b16 %v257
        %v349 = vunpack.c.h.b16 %v257
        %v350 = vunpack.c.l.b16 %v258
        %v351 = vunpack.c.h.b16 %v258
        %v352 = vunpack.c.l.b16 %v259
        %v353 = vunpack.c.h.b16 %v259
        %v354 = vunpack.c.l.b16 %v260
        %v355 = vunpack.c.h.b16 %v260
        %v356 = vunpack.c.l.b16 %v261
        %v357 = vunpack.c.h.b16 %v261
        %v358 = vunpack.c.l.b16 %v262
        %v359 = vunpack.c.h.b16 %v262
        %v360 = vunpack.c.l.b16 %v263
        %v361 = vunpack.c.h.b16 %v263
        %v362 = vunpack.c.l.b16 %v264
        %v363 = vunpack.c.h.b16 %v264
        %v364 = vunpack.c.l.b16 %v265
        %v365 = vunpack.c.h.b16 %v265
        %v366 = vunpack.c.l.b16 %v266
        %v367 = vunpack.c.h.b16 %v266
        %v368 = vunpack.c.l.b16 %v267
        %v369 = vunpack.c.h.b16 %v267
        %v370 = vunpack.c.l.b16 %v268
        %v371 = vunpack.c.h.b16 %v268
        %v372 = vunpack.c.l.b16 %v269
        %v373 = vunpack.c.h.b16 %v269
        %v374 = vunpack.c.l.b16 %v270
        %v375 = vunpack.c.h.b16 %v270
        %v376 = vunpack.c.l.b16 %v271
        %v377 = vunpack.c.h.b16 %v271
        %v378 = vunpack.c.l.b16 %v272
        %v379 = vunpack.c.h.b16 %v272
        %v380 = vunpack.c.l.b16 %v273
        %v381 = vunpack.c.h.b16 %v273
        %v382 = vunpack.c.l.b16 %v274
        %v383 = vunpack.c.h.b16 %v274
        %v384 = vunpack.c.l.b16 %v275
        %v385 = vunpack.c.h.b16 %v275
        %v386 = vunpack.c.l.b16 %v276
        %v387 = vunpack.c.h.b16 %v276
        %v388 = vunpack.c.l.b16 %v277
        %v389 = vunpack.c.h.b16 %v277
        %v390 = vunpack.c.l.b16 %v278
        %v391 = vunpack.c.h.b16 %v278
        %v392 = vunpack.c.l.b16 %v279
        %v393 = vunpack.c.h.b16 %v279
        %v394 = vunpack.c.l.b16 %v280
        %v395 = vunpack.c.h.b16 %v280
        %v396 = vunpack.c.l.b16 %v281
        %v397 = vunpack.c.h.b16 %v281
        %v398 = vunpack.c.l.b16 %v282
        %v399 = vunpack.c.h.b16 %v282
        %v400 = vunpack.c.l.b16 %v283
        %v401 = vunpack.c.h.b16 %v283
        %v402 = vpack.c.b16 %v342, %v338
        %v403 = vpack.c.b16 %v343, %v339
        %v404 = vpack.c.b16 %v344, %v340
        %v405 = vpack.c.b16 %v345, %v341
        %v406 = vpack.c.b16 %v350, %v346
        %v407 = vpack.c.b16 %v351, %v347
        %v408 = vpack.c.b16 %v352, %v348
        %v409 = vpack.c.b16 %v353, %v349
        %v410 = vpack.c.b16 %v358, %v354
        %v411 = vpack.c.b16 %v359, %v355
        %v412 = vpack.c.b16 %v360, %v356
        %v413 = vpack.c.b16 %v361, %v357
        %v414 = vpack.c.b16 %v366, %v362
        %v415 = vpack.c.b16 %v367, %v363
        %v416 = vpack.c.b16 %v368, %v364
        %v417 = vpack.c.b16 %v369, %v365
        %v418 = vpack.c.b16 %v374, %v370
        %v419 = vpack.c.b16 %v375, %v371
        %v420 = vpack.c.b16 %v376, %v372
        %v421 = vpack.c.b16 %v377, %v373
        %v422 = vpack.c.b16 %v382, %v378
        %v423 = vpack.c.b16 %v383, %v379
        %v424 = vpack.c.b16 %v384, %v380
        %v425 = vpack.c.b16 %v385, %v381
        %v426 = vpack.c.b16 %v390, %v386
        %v427 = vpack.c.b16 %v391, %v387
        %v428 = vpack.c.b16 %v392, %v388
        %v429 = vpack.c.b16 %v393, %v389
        %v430 = vpack.c.b16 %v398, %v394
        %v431 = vpack.c.b16 %v399, %v395
        %v432 = vpack.c.b16 %v400, %v396
        %v433 = vpack.c.b16 %v401, %v397
        %466 = vmatprep.subr.bf16.mxu0 %v431
        %467 = vmatpush1.bf16.msra.mxu0 %v430
        %468 = vmatprep.subr.bf16.mxu0 %v427
        %469 = vmatpush1.bf16.msra.mxu0 %v426
        %470 = vmatprep.subr.bf16.mxu0 %v423
        %471 = vmatpush1.bf16.msra.mxu0 %v422
        %472 = vmatprep.subr.bf16.mxu0 %v419
        %473 = vmatpush1.bf16.msra.mxu0 %v418
        %474 = vmatprep.subr.bf16.mxu0 %v415
        %475 = vmatpush1.bf16.msra.mxu0 %v414
        %476 = vmatprep.subr.bf16.mxu0 %v411
        %477 = vmatpush1.bf16.msra.mxu0 %v410
        %478 = vmatprep.subr.bf16.mxu0 %v407
        %479 = vmatpush1.bf16.msra.mxu0 %v406
        %480 = vmatprep.subr.bf16.mxu0 %v403
        %481 = vmatpush1.bf16.msra.mxu0 %v402
        %482 = vmatprep.subr.bf16.mxu0 0
        %483 = vmatpush2.bf16.msra.mxu0 0
        %484 = vmatprep.subr.bf16.mxu0 0
        %485 = vmatpush2.bf16.msra.mxu0 0
        %486 = vmatprep.subr.bf16.mxu0 0
        %487 = vmatpush2.bf16.msra.mxu0 0
        %488 = vmatprep.subr.bf16.mxu0 0
        %489 = vmatpush2.bf16.msra.mxu0 0
        %490 = vmatprep.subr.bf16.mxu0 0
        %491 = vmatpush2.bf16.msra.mxu0 0
        %492 = vmatprep.subr.bf16.mxu0 0
        %493 = vmatpush2.bf16.msra.mxu0 0
        %494 = vmatprep.subr.bf16.mxu0 0
        %495 = vmatpush2.bf16.msra.mxu0 0
        %496 = vmatprep.subr.bf16.mxu0 0
        %497 = vmatpush2.bf16.msra.mxu0 0
        %498 = vmatprep.mubr.bf16.mxu0 0
        %499 = vmatmul.mubr.bf16.gmra.mxu0 %v251
        %v500 = vpop.f32.mrf.mxu0
        %v501 = vadd.f32 %v289, %v500
        %v502 = vpop.f32.mrf.mxu0
        %v503 = vadd.f32 %v293, %v502
        %v504 = vpop.f32.mrf.mxu0
        %v505 = vadd.f32 %v289, %v504
        %v506 = vpop.f32.mrf.mxu0
        %v507 = vadd.f32 %v293, %v506
        %508 = vdwg.mxu0
        %509 = vmatprep.subr.bf16.mxu0 %v433
        %510 = vmatpush1.bf16.msra.mxu0 %v432
        %511 = vmatprep.subr.bf16.mxu0 %v429
        %512 = vmatpush1.bf16.msra.mxu0 %v428
        %513 = vmatprep.subr.bf16.mxu0 %v425
        %514 = vmatpush1.bf16.msra.mxu0 %v424
        %515 = vmatprep.subr.bf16.mxu0 %v421
        %516 = vmatpush1.bf16.msra.mxu0 %v420
        %517 = vmatprep.subr.bf16.mxu0 %v417
        %518 = vmatpush1.bf16.msra.mxu0 %v416
        %519 = vmatprep.subr.bf16.mxu0 %v413
        %520 = vmatpush1.bf16.msra.mxu0 %v412
        %521 = vmatprep.subr.bf16.mxu0 %v409
        %522 = vmatpush1.bf16.msra.mxu0 %v408
        %523 = vmatprep.subr.bf16.mxu0 %v405
        %524 = vmatpush1.bf16.msra.mxu0 %v404
        %525 = vmatprep.subr.bf16.mxu0 0
        %526 = vmatpush2.bf16.msra.mxu0 0
        %527 = vmatprep.subr.bf16.mxu0 0
        %528 = vmatpush2.bf16.msra.mxu0 0
        %529 = vmatprep.subr.bf16.mxu0 0
        %530 = vmatpush2.bf16.msra.mxu0 0
        %531 = vmatprep.subr.bf16.mxu0 0
        %532 = vmatpush2.bf16.msra.mxu0 0
        %533 = vmatprep.subr.bf16.mxu0 0
        %534 = vmatpush2.bf16.msra.mxu0 0
        %535 = vmatprep.subr.bf16.mxu0 0
        %536 = vmatpush2.bf16.msra.mxu0 0
        %537 = vmatprep.subr.bf16.mxu0 0
        %538 = vmatpush2.bf16.msra.mxu0 0
        %539 = vmatprep.subr.bf16.mxu0 0
        %540 = vmatpush2.bf16.msra.mxu0 0
        %541 = vmatprep.mubr.bf16.mxu0 0
        %542 = vmatmul.mubr.bf16.gmra.mxu0 %v251
        %v543 = vpop.f32.mrf.mxu0
        %v544 = vadd.f32 %v297, %v543
        %v545 = vpop.f32.mrf.mxu0
        %v546 = vadd.f32 %v301, %v545
        %v547 = vpop.f32.mrf.mxu0
        %v548 = vadd.f32 %v297, %v547
        %v549 = vpop.f32.mrf.mxu0
        %v550 = vadd.f32 %v301, %v549
        %551 = vdwg.mxu0
        %552 = vst [vmem:[%s218] sm:$0xff] %v501
        %553 = vst [vmem:[%s218 + $0x8] sm:$0xff] %v503
        %554 = vst [vmem:[%s218 + $0x10] sm:$0xff] %v544
        %555 = vst [vmem:[%s218 + $0x18] sm:$0xff] %v546
        %556 = vst [vmem:[%s218 + $0x20] sm:$0xff] %v505
        %557 = vst [vmem:[%s218 + $0x28] sm:$0xff] %v507
        %558 = vst [vmem:[%s218 + $0x30] sm:$0xff] %v548
        %559 = vst [vmem:[%s218 + $0x38] sm:$0xff] %v550
        %s560 = sand.u32 %s137, 1
        %s561 = scalar_lea.sflag [#allocation3], %s560
        %s562 = sand.u32 %s137, 1
        %s563 = smul.addr %s562, 64
        %s564 = scalar_lea.vmem [#allocation2], %s563
        // Predicated region
        $region41: #{prediction_mlp.3} parent=39 // pred_check
          %p565 = pneg %p147
        $region42: #{prediction_mlp.3} parent=39 // pred_check_branch
          %567 = sbr.rel (%p565) target = $region44
        $region43: #{prediction_mlp.3} parent=39 // pred_region
          %s568 = smul.u32 2, %s19
          %s570 = ssub.s32 1024, 1024
          %571 = vsyncadd %s561, %s570
          %s572 = smul.addr %s568, 4
          %s573 = smul.addr %s572, 128
          %s574 = scalar_lea.hbm %s5, %s573
          %s575 = sshll.u32 %s564, 4
          %s576 = int_to_ptr.vmem [resolvable:$true] %s575
          %581 = dma.vmem_to_hbm [thread:$0]  %s576, 1024, %s574, %s561, 512, 512, 32
        $region44: #{prediction_mlp.3} parent=39 // pred_fallthru
          _
      $region40: #{prediction_mlp.3} parent=5 // pred_fallthru
        _
      %p582 = scmp.le.s32.totalorder 2, %s14
      // Predicated region
      $region45: #{prediction_mlp.3} parent=5 // pred_check
        %p583 = pneg %p582
      $region46: #{prediction_mlp.3} parent=5 // pred_check_branch
        %585 = sbr.rel (%p583) target = $region48
      $region47: #{prediction_mlp.3} parent=5 // pred_region
        %s586 = ssub.s32 %s14, 2
        // Predicated region
        $region49: #{prediction_mlp.3} parent=47 // pred_check
          %p587 = pneg %p153
        $region50: #{prediction_mlp.3} parent=47 // pred_check_branch
          %589 = sbr.rel (%p587) target = $region52
        $region51: #{prediction_mlp.3} parent=47 // pred_region
          %s590 = sand.u32 %s138, 1
          %s591 = scalar_lea.sflag [#allocation3], %s590
          %s592 = sand.u32 %s138, 1
          %s593 = smul.addr %s592, 64
          %s594 = scalar_lea.vmem [#allocation2], %s593
          %595 = dma.done %s591, 1024
        $region52: #{prediction_mlp.3} parent=47 // pred_fallthru
          _
      $region48: #{prediction_mlp.3} parent=5 // pred_fallthru
        _
    $region6: #{prediction_mlp.3} parent=1 // loop_footer
      %s18 = sadd.s32 1, %s14
    $region7: #{prediction_mlp.3} parent=1 // loop_footer_branch
      %13 = sbr.rel target = $region3
    $region8: #{prediction_mlp.3} parent=1 // loop_exit
      _
    %596 = vsyncpa [#allocation3], 1
    %s597 = scalar_lea.sflag [#allocation3], 1
    %598 = vsyncpa %s597, 1

// kernel: prediction_mlp.2
$region0: #{prediction_mlp.2}
  #allocation0 [shape = 'u32[]', space=smem, size = 0x4, offset = 0x4, fixed_abs, tag = 'smem constant byte address 0x4 - core index']
  #allocation1 [shape = 'u32[144,128]{1,0:T(1,128)}', space=vmem, size = 0x12000, scoped, tag = 'internal scratch']
  %s0 = inlined_call_operand.hbm [shape: f32[64,512], index: 0, kind: input, shape index: {}]
  %s1 = inlined_call_operand.hbm [shape: bf16[512,128], index: 1, kind: input, shape index: {}]
  %s2 = inlined_call_operand.vmem [shape: bf16[64,128], index: 2, kind: output, shape index: {0}]
  %s3 = inlined_call_operand.vmem [shape: f32[4,1,128], index: 3, kind: output, shape index: {1}]
  %s4 = inlined_call_operand.vmem [shape: f32[4,1,128], index: 4, kind: output, shape index: {2}]
  %5 = xla_tuple %s2, %s3, %s4
  %s6 = sld [smem:[#allocation0]]
  $region65: #{prediction_mlp.2} parent=0
    _
  %s8 = ssub.s32 1, %s6
  %s9 = scalar_select 0, %s8, %s6
  $region1: #{prediction_mlp.2} parent=0
    #allocation2 [shape = 'u8[65536]{0}', space=vmem, size = 0x10000, scoped, tag = 'input window, operand 0']
    #allocation3 [shape = 's32[2]{0}', space=sflag, size = 0x8, scoped, tag = 'scoped memory for prediction_mlp.2']
    #allocation4 [shape = 'u8[131072]{0}', space=vmem, size = 0x20000, scoped, tag = 'input window, operand 1, single buffered']
    #allocation5 [shape = 's32[1]{0}', space=sflag, size = 0x4, scoped, tag = 'scoped memory for prediction_mlp.2']
    %10 = vsyncpa [#allocation3], 0
    %s11 = scalar_lea.sflag [#allocation3], 1
    %12 = vsyncpa %s11, 0
    %13 = vsyncpa [#allocation5], 0
    loop: start=0, step=1, limit=6
    $region2: #{prediction_mlp.2} parent=1 // loop_pre_header
      _
    $region3: #{prediction_mlp.2} parent=1 // loop_header
      %s15 = sphi 0, %s19
      %p16 = scmp.ge.s32.totalorder %s15, 6
      %s25 = sphi 0, %s27
      %s28 = sphi 0, %s25
      %s29 = sphi 0, %s28
      %s45 = sphi 0, %s29
      %s49 = sphi 0, %s49
      %s51 = sphi 0, %s49
      %s52 = sphi 0, %s51
      %s66 = sphi 0, %s52
      %s72 = sphi 0, %s74
      %s75 = sphi 0, %s72
      %s76 = sphi 0, %s75
      %s92 = sphi 0, %s76
      %s98 = sphi 0, %s100
      %s101 = sphi 0, %s98
      %s102 = sphi 0, %s101
      %s118 = sphi 0, %s102
      %s124 = sphi 0, %s126
      %s127 = sphi 0, %s124
      %s128 = sphi 0, %s127
      %s144 = sphi 0, %s128
    $region4: #{prediction_mlp.2} parent=1 // loop_header_branch
      %18 = sbr.rel (%p16) target = $region8
    $region5: #{prediction_mlp.2} parent=1 // loop_body
      %s20 = ssub.s32 %s15, 1
      %s21 = ssub.s32 %s15, 2
      %s22 = sadd.s32 %s15, 1
      %s23 = ssub.s32 %s15, %s22
      %p24 = scmp.eq.s32.totalorder %s23, 0
      %s26 = sadd.s32 %s25, 1
      %s27 = scalar_select %p24, %s25, %s26
      %p30 = pneg %p24
      %p31 = scmp.eq.s32.totalorder %s15, 3
      %p32 = por %p30, %p31
      %p33 = scmp.ne.s32.totalorder %s25, %s28
      %p34 = scmp.eq.s32.totalorder %s15, 0
      %p35 = por %p33, %p34
      %p36 = scmp.ne.s32.totalorder %s25, %s28
      %p37 = scmp.eq.s32.totalorder %s20, 3
      %p38 = por %p36, %p37
      %p39 = scmp.ne.s32.totalorder %s28, %s29
      %p40 = scmp.eq.s32.totalorder %s20, 0
      %p41 = por %p39, %p40
      %p42 = scmp.ne.s32.totalorder %s28, %s29
      %p43 = scmp.eq.s32.totalorder %s21, 3
      %p44 = por %p42, %p43
      %p46 = scmp.ne.s32.totalorder %s29, %s45
      %p47 = scmp.eq.s32.totalorder %s21, 0
      %p48 = por %p46, %p47
      %s50 = sadd.s32 %s49, 1
      %p53 = scmp.eq.s32.totalorder %s15, 3
      %p54 = scmp.ne.s32.totalorder %s49, %s51
      %p55 = scmp.eq.s32.totalorder %s15, 0
      %p56 = por %p54, %p55
      %p57 = scmp.ne.s32.totalorder %s49, %s51
      %p58 = scmp.eq.s32.totalorder %s20, 3
      %p59 = por %p57, %p58
      %p60 = scmp.ne.s32.totalorder %s51, %s52
      %p61 = scmp.eq.s32.totalorder %s20, 0
      %p62 = por %p60, %p61
      %p63 = scmp.ne.s32.totalorder %s51, %s52
      %p64 = scmp.eq.s32.totalorder %s21, 3
      %p65 = por %p63, %p64
      %p67 = scmp.ne.s32.totalorder %s52, %s66
      %p68 = scmp.eq.s32.totalorder %s21, 0
      %p69 = por %p67, %p68
      %s70 = ssub.s32 %s15, %s22
      %p71 = scmp.eq.s32.totalorder %s70, 0
      %s73 = sadd.s32 %s72, 1
      %s74 = scalar_select %p71, %s72, %s73
      %p77 = pneg %p71
      %p78 = scmp.eq.s32.totalorder %s15, 3
      %p79 = por %p77, %p78
      %p80 = scmp.ne.s32.totalorder %s72, %s75
      %p81 = scmp.eq.s32.totalorder %s15, 0
      %p82 = por %p80, %p81
      %p83 = scmp.ne.s32.totalorder %s72, %s75
      %p84 = scmp.eq.s32.totalorder %s20, 3
      %p85 = por %p83, %p84
      %p86 = scmp.ne.s32.totalorder %s75, %s76
      %p87 = scmp.eq.s32.totalorder %s20, 0
      %p88 = por %p86, %p87
      %p89 = scmp.ne.s32.totalorder %s75, %s76
      %p90 = scmp.eq.s32.totalorder %s21, 3
      %p91 = por %p89, %p90
      %p93 = scmp.ne.s32.totalorder %s76, %s92
      %p94 = scmp.eq.s32.totalorder %s21, 0
      %p95 = por %p93, %p94
      %s96 = ssub.s32 %s15, %s22
      %p97 = scmp.eq.s32.totalorder %s96, 0
      %s99 = sadd.s32 %s98, 1
      %s100 = scalar_select %p97, %s98, %s99
      %p103 = pneg %p97
      %p104 = scmp.eq.s32.totalorder %s15, 3
      %p105 = por %p103, %p104
      %p106 = scmp.ne.s32.totalorder %s98, %s101
      %p107 = scmp.eq.s32.totalorder %s15, 0
      %p108 = por %p106, %p107
      %p109 = scmp.ne.s32.totalorder %s98, %s101
      %p110 = scmp.eq.s32.totalorder %s20, 3
      %p111 = por %p109, %p110
      %p112 = scmp.ne.s32.totalorder %s101, %s102
      %p113 = scmp.eq.s32.totalorder %s20, 0
      %p114 = por %p112, %p113
      %p115 = scmp.ne.s32.totalorder %s101, %s102
      %p116 = scmp.eq.s32.totalorder %s21, 3
      %p117 = por %p115, %p116
      %p119 = scmp.ne.s32.totalorder %s102, %s118
      %p120 = scmp.eq.s32.totalorder %s21, 0
      %p121 = por %p119, %p120
      %s122 = ssub.s32 %s15, %s22
      %p123 = scmp.eq.s32.totalorder %s122, 0
      %s125 = sadd.s32 %s124, 1
      %s126 = scalar_select %p123, %s124, %s125
      %p129 = pneg %p123
      %p130 = scmp.eq.s32.totalorder %s15, 3
      %p131 = por %p129, %p130
      %p132 = scmp.ne.s32.totalorder %s124, %s127
      %p133 = scmp.eq.s32.totalorder %s15, 0
      %p134 = por %p132, %p133
      %p135 = scmp.ne.s32.totalorder %s124, %s127
      %p136 = scmp.eq.s32.totalorder %s20, 3
      %p137 = por %p135, %p136
      %p138 = scmp.ne.s32.totalorder %s127, %s128
      %p139 = scmp.eq.s32.totalorder %s20, 0
      %p140 = por %p138, %p139
      %p141 = scmp.ne.s32.totalorder %s127, %s128
      %p142 = scmp.eq.s32.totalorder %s21, 3
      %p143 = por %p141, %p142
      %p145 = scmp.ne.s32.totalorder %s128, %s144
      %p146 = scmp.eq.s32.totalorder %s21, 0
      %p147 = por %p145, %p146
      %p148 = scmp.le.s32.totalorder 1, %s15
      %p149 = scmp.lt.s32.totalorder %s15, 5
      %p150 = pnand %p148, %p149
      %p151 = pneg %p150
      // Predicated region
      $region9: #{prediction_mlp.2} parent=5 // pred_check
        _
      $region10: #{prediction_mlp.2} parent=5 // pred_check_branch
        %153 = sbr.rel (%p150) target = $region12
      $region11: #{prediction_mlp.2} parent=5 // pred_region
        %s154 = ssub.s32 %s15, 1
        // Predicated region
        $region13: #{prediction_mlp.2} parent=11 // pred_check
          %p155 = pneg %p62
        $region14: #{prediction_mlp.2} parent=11 // pred_check_branch
          %157 = sbr.rel (%p155) target = $region16
        $region15: #{prediction_mlp.2} parent=11 // pred_region
          %s159 = ssub.s32 4096, 4096
          %160 = vsyncadd [#allocation5], %s159
          %s161 = sshll.u32 [#allocation4], 4
          %s162 = int_to_ptr.vmem [resolvable:$true] %s161
          %167 = dma.hbm_to_vmem [thread:$0]  %s1, 4096, %s162, [#allocation5], 64, 64, 4
        $region16: #{prediction_mlp.2} parent=11 // pred_fallthru
          _
      $region12: #{prediction_mlp.2} parent=5 // pred_fallthru
        _
      %p168 = scmp.lt.s32.totalorder %s15, 4
      // Predicated region
      $region17: #{prediction_mlp.2} parent=5 // pred_check
        %p169 = pneg %p168
      $region18: #{prediction_mlp.2} parent=5 // pred_check_branch
        %171 = sbr.rel (%p169) target = $region20
      $region19: #{prediction_mlp.2} parent=5 // pred_region
        // Predicated region
        $region21: #{prediction_mlp.2} parent=19 // pred_check
          %p172 = pneg %p35
        $region22: #{prediction_mlp.2} parent=19 // pred_check_branch
          %174 = sbr.rel (%p172) target = $region24
        $region23: #{prediction_mlp.2} parent=19 // pred_region
          %s175 = sand.u32 %s25, 1
          %s176 = scalar_lea.sflag [#allocation3], %s175
          %s177 = sand.u32 %s25, 1
          %s178 = smul.addr %s177, 64
          %s179 = scalar_lea.vmem [#allocation2], %s178
          %s180 = smul.u32 2, %s15
          %s182 = ssub.s32 1024, 1024
          %183 = vsyncadd %s176, %s182
          %s184 = smul.addr %s180, 4
          %s185 = smul.addr %s184, 128
          %s186 = scalar_lea.hbm %s0, %s185
          %s187 = sshll.u32 %s179, 4
          %s188 = int_to_ptr.vmem [resolvable:$true] %s187
          %193 = dma.hbm_to_vmem [thread:$0]  %s186, 1024, %s188, %s176, 512, 512, 32
        $region24: #{prediction_mlp.2} parent=19 // pred_fallthru
          _
      $region20: #{prediction_mlp.2} parent=5 // pred_fallthru
        _
      %p194 = scmp.le.s32.totalorder 1, %s15
      %p195 = scmp.lt.s32.totalorder %s15, 5
      %p196 = pnand %p194, %p195
      %p197 = pneg %p196
      // Predicated region
      $region25: #{prediction_mlp.2} parent=5 // pred_check
        _
      $region26: #{prediction_mlp.2} parent=5 // pred_check_branch
        %199 = sbr.rel (%p196) target = $region28
      $region27: #{prediction_mlp.2} parent=5 // pred_region
        %s200 = ssub.s32 %s15, 1
        %s201 = sand.u32 %s28, 1
        %s202 = scalar_lea.sflag [#allocation3], %s201
        %s203 = sand.u32 %s28, 1
        %s204 = smul.addr %s203, 64
        %s205 = scalar_lea.vmem [#allocation2], %s204
        // Predicated region
        $region29: #{prediction_mlp.2} parent=27 // pred_check
          %p206 = pneg %p41
        $region30: #{prediction_mlp.2} parent=27 // pred_check_branch
          %208 = sbr.rel (%p206) target = $region32
        $region31: #{prediction_mlp.2} parent=27 // pred_region
          %209 = dma.done %s202, 1024
        $region32: #{prediction_mlp.2} parent=27 // pred_fallthru
          _
        // Predicated region
        $region33: #{prediction_mlp.2} parent=27 // pred_check
          %p210 = pneg %p62
        $region34: #{prediction_mlp.2} parent=27 // pred_check_branch
          %212 = sbr.rel (%p210) target = $region36
        $region35: #{prediction_mlp.2} parent=27 // pred_region
          %213 = dma.done [#allocation5], 4096
        $region36: #{prediction_mlp.2} parent=27 // pred_fallthru
          _
        %s214 = sand.u32 %s28, 1
        %s215 = scalar_lea.sflag [#allocation3], %s214
        %s216 = sand.u32 %s28, 1
        %s217 = smul.addr %s216, 64
        %s218 = scalar_lea.vmem [#allocation2], %s217
        %p219 = pneg %p41
        %p220 = pneg %p38
        %p221 = pneg %p62
        %p222 = pneg %p59
        %p223 = pneg %p88
        %p224 = pneg %p85
        %s225 = smul.u32 2, %s20
        %p226 = scmp.lt.s32.totalorder %s225, 7
        %s227 = scalar_select %p226, %s225, 7
        %s228 = smul.addr %s227, 4
        %s229 = scalar_lea.vmem %s2, %s228
        %p230 = pneg %p114
        %p231 = pneg %p111
        %p232 = scmp.lt.s32.totalorder %s20, 3
        %s233 = scalar_select %p232, %s20, 3
        %s234 = scalar_lea.vmem %s3, %s233
        %p235 = pneg %p140
        %p236 = pneg %p137
        %p237 = scmp.lt.s32.totalorder %s20, 3
        %s238 = scalar_select %p237, %s20, 3
        %s239 = scalar_lea.vmem %s4, %s238
        %s240 = smul.u32 2, %s20
        %s241 = smul.u32 2, %s20
        %p242 = scmp.lt.s32.totalorder %s241, 7
        %s243 = scalar_select %p242, %s241, 7
        %s244 = smul.addr %s243, 4
        %s245 = scalar_lea.vmem %s2, %s244
        %s246 = smul.u32 2, %s20
        %p247 = scmp.lt.s32.totalorder %s20, 3
        %s248 = scalar_select %p247, %s20, 3
        %s249 = scalar_lea.vmem %s3, %s248
        %p250 = scmp.lt.s32.totalorder %s20, 3
        %s251 = scalar_select %p250, %s20, 3
        %s252 = scalar_lea.vmem %s4, %s251
        %v254 = vld [vmem:[%s205] sm:$0xff]
        %v255 = vld [vmem:[%s205 + $0x8] sm:$0xff]
        %v256 = vld [vmem:[%s205 + $0x10] sm:$0xff]
        %v257 = vld [vmem:[%s205 + $0x18] sm:$0xff]
        %v258 = vld [vmem:[%s205 + $0x20] sm:$0xff]
        %v259 = vld [vmem:[%s205 + $0x28] sm:$0xff]
        %v260 = vld [vmem:[%s205 + $0x30] sm:$0xff]
        %v261 = vld [vmem:[%s205 + $0x38] sm:$0xff]
        %v262 = vpack.c.bf16 %v258, %v254
        %v263 = vpack.c.bf16 %v259, %v255
        %v264 = vpack.c.bf16 %v260, %v256
        %v265 = vpack.c.bf16 %v261, %v257
        %v266 = vld [vmem:[#allocation4] sm:$0xf]
        %v267 = vld [vmem:[#allocation4 + $0x4] sm:$0xf]
        %v268 = vld [vmem:[#allocation4 + $0x8] sm:$0xf]
        %v269 = vld [vmem:[#allocation4 + $0xc] sm:$0xf]
        %v270 = vld [vmem:[#allocation4 + $0x10] sm:$0xf]
        %v271 = vld [vmem:[#allocation4 + $0x14] sm:$0xf]
        %v272 = vld [vmem:[#allocation4 + $0x18] sm:$0xf]
        %v273 = vld [vmem:[#allocation4 + $0x1c] sm:$0xf]
        %v274 = vld [vmem:[#allocation4 + $0x20] sm:$0xf]
        %v275 = vld [vmem:[#allocation4 + $0x24] sm:$0xf]
        %v276 = vld [vmem:[#allocation4 + $0x28] sm:$0xf]
        %v277 = vld [vmem:[#allocation4 + $0x2c] sm:$0xf]
        %v278 = vld [vmem:[#allocation4 + $0x30] sm:$0xf]
        %v279 = vld [vmem:[#allocation4 + $0x34] sm:$0xf]
        %v280 = vld [vmem:[#allocation4 + $0x38] sm:$0xf]
        %v281 = vld [vmem:[#allocation4 + $0x3c] sm:$0xf]
        %v282 = vld [vmem:[#allocation4 + $0x40] sm:$0xf]
        %v283 = vld [vmem:[#allocation4 + $0x44] sm:$0xf]
        %v284 = vld [vmem:[#allocation4 + $0x48] sm:$0xf]
        %v285 = vld [vmem:[#allocation4 + $0x4c] sm:$0xf]
        %v286 = vld [vmem:[#allocation4 + $0x50] sm:$0xf]
        %v287 = vld [vmem:[#allocation4 + $0x54] sm:$0xf]
        %v288 = vld [vmem:[#allocation4 + $0x58] sm:$0xf]
        %v289 = vld [vmem:[#allocation4 + $0x5c] sm:$0xf]
        %v290 = vld [vmem:[#allocation4 + $0x60] sm:$0xf]
        %v291 = vld [vmem:[#allocation4 + $0x64] sm:$0xf]
        %v292 = vld [vmem:[#allocation4 + $0x68] sm:$0xf]
        %v293 = vld [vmem:[#allocation4 + $0x6c] sm:$0xf]
        %v294 = vld [vmem:[#allocation4 + $0x70] sm:$0xf]
        %v295 = vld [vmem:[#allocation4 + $0x74] sm:$0xf]
        %v296 = vld [vmem:[#allocation4 + $0x78] sm:$0xf]
        %v297 = vld [vmem:[#allocation4 + $0x7c] sm:$0xf]
        %v298 = vld [vmem:[#allocation4 + $0x80] sm:$0xf]
        %v299 = vld [vmem:[#allocation4 + $0x84] sm:$0xf]
        %v300 = vld [vmem:[#allocation4 + $0x88] sm:$0xf]
        %v301 = vld [vmem:[#allocation4 + $0x8c] sm:$0xf]
        %v302 = vld [vmem:[#allocation4 + $0x90] sm:$0xf]
        %v303 = vld [vmem:[#allocation4 + $0x94] sm:$0xf]
        %v304 = vld [vmem:[#allocation4 + $0x98] sm:$0xf]
        %v305 = vld [vmem:[#allocation4 + $0x9c] sm:$0xf]
        %v306 = vld [vmem:[#allocation4 + $0xa0] sm:$0xf]
        %v307 = vld [vmem:[#allocation4 + $0xa4] sm:$0xf]
        %v308 = vld [vmem:[#allocation4 + $0xa8] sm:$0xf]
        %v309 = vld [vmem:[#allocation4 + $0xac] sm:$0xf]
        %v310 = vld [vmem:[#allocation4 + $0xb0] sm:$0xf]
        %v311 = vld [vmem:[#allocation4 + $0xb4] sm:$0xf]
        %v312 = vld [vmem:[#allocation4 + $0xb8] sm:$0xf]
        %v313 = vld [vmem:[#allocation4 + $0xbc] sm:$0xf]
        %v314 = vld [vmem:[#allocation4 + $0xc0] sm:$0xf]
        %v315 = vld [vmem:[#allocation4 + $0xc4] sm:$0xf]
        %v316 = vld [vmem:[#allocation4 + $0xc8] sm:$0xf]
        %v317 = vld [vmem:[#allocation4 + $0xcc] sm:$0xf]
        %v318 = vld [vmem:[#allocation4 + $0xd0] sm:$0xf]
        %v319 = vld [vmem:[#allocation4 + $0xd4] sm:$0xf]
        %v320 = vld [vmem:[#allocation4 + $0xd8] sm:$0xf]
        %v321 = vld [vmem:[#allocation4 + $0xdc] sm:$0xf]
        %v322 = vld [vmem:[#allocation4 + $0xe0] sm:$0xf]
        %v323 = vld [vmem:[#allocation4 + $0xe4] sm:$0xf]
        %v324 = vld [vmem:[#allocation4 + $0xe8] sm:$0xf]
        %v325 = vld [vmem:[#allocation4 + $0xec] sm:$0xf]
        %v326 = vld [vmem:[#allocation4 + $0xf0] sm:$0xf]
        %v327 = vld [vmem:[#allocation4 + $0xf4] sm:$0xf]
        %v328 = vld [vmem:[#allocation4 + $0xf8] sm:$0xf]
        %v329 = vld [vmem:[#allocation4 + $0xfc] sm:$0xf]
        %v394 = vunpack.c.l.b16 %v266
        %v395 = vunpack.c.l.b16 %v267
        %v396 = vunpack.c.l.b16 %v268
        %v397 = vunpack.c.l.b16 %v269
        %v398 = vunpack.c.l.b16 %v270
        %v399 = vunpack.c.l.b16 %v271
        %v400 = vunpack.c.l.b16 %v272
        %v401 = vunpack.c.l.b16 %v273
        %v402 = vunpack.c.l.b16 %v274
        %v403 = vunpack.c.l.b16 %v275
        %v404 = vunpack.c.l.b16 %v276
        %v405 = vunpack.c.l.b16 %v277
        %v406 = vunpack.c.l.b16 %v278
        %v407 = vunpack.c.l.b16 %v279
        %v408 = vunpack.c.l.b16 %v280
        %v409 = vunpack.c.l.b16 %v281
        %v410 = vunpack.c.l.b16 %v282
        %v411 = vunpack.c.l.b16 %v283
        %v412 = vunpack.c.l.b16 %v284
        %v413 = vunpack.c.l.b16 %v285
        %v414 = vunpack.c.l.b16 %v286
        %v415 = vunpack.c.l.b16 %v287
        %v416 = vunpack.c.l.b16 %v288
        %v417 = vunpack.c.l.b16 %v289
        %v418 = vunpack.c.l.b16 %v290
        %v419 = vunpack.c.l.b16 %v291
        %v420 = vunpack.c.l.b16 %v292
        %v421 = vunpack.c.l.b16 %v293
        %v422 = vunpack.c.l.b16 %v294
        %v423 = vunpack.c.l.b16 %v295
        %v424 = vunpack.c.l.b16 %v296
        %v425 = vunpack.c.l.b16 %v297
        %v426 = vunpack.c.l.b16 %v298
        %v427 = vunpack.c.l.b16 %v299
        %v428 = vunpack.c.l.b16 %v300
        %v429 = vunpack.c.l.b16 %v301
        %v430 = vunpack.c.l.b16 %v302
        %v431 = vunpack.c.l.b16 %v303
        %v432 = vunpack.c.l.b16 %v304
        %v433 = vunpack.c.l.b16 %v305
        %v434 = vunpack.c.l.b16 %v306
        %v435 = vunpack.c.l.b16 %v307
        %v436 = vunpack.c.l.b16 %v308
        %v437 = vunpack.c.l.b16 %v309
        %v438 = vunpack.c.l.b16 %v310
        %v439 = vunpack.c.l.b16 %v311
        %v440 = vunpack.c.l.b16 %v312
        %v441 = vunpack.c.l.b16 %v313
        %v442 = vunpack.c.l.b16 %v314
        %v443 = vunpack.c.l.b16 %v315
        %v444 = vunpack.c.l.b16 %v316
        %v445 = vunpack.c.l.b16 %v317
        %v446 = vunpack.c.l.b16 %v318
        %v447 = vunpack.c.l.b16 %v319
        %v448 = vunpack.c.l.b16 %v320
        %v449 = vunpack.c.l.b16 %v321
        %v450 = vunpack.c.l.b16 %v322
        %v451 = vunpack.c.l.b16 %v323
        %v452 = vunpack.c.l.b16 %v324
        %v453 = vunpack.c.l.b16 %v325
        %v454 = vunpack.c.l.b16 %v326
        %v455 = vunpack.c.l.b16 %v327
        %v456 = vunpack.c.l.b16 %v328
        %v457 = vunpack.c.l.b16 %v329
        %v458 = vpack.c.b16 %v395, %v394
        %v459 = vpack.c.b16 %v397, %v396
        %v460 = vpack.c.b16 %v399, %v398
        %v461 = vpack.c.b16 %v401, %v400
        %v462 = vpack.c.b16 %v403, %v402
        %v463 = vpack.c.b16 %v405, %v404
        %v464 = vpack.c.b16 %v407, %v406
        %v465 = vpack.c.b16 %v409, %v408
        %v466 = vpack.c.b16 %v411, %v410
        %v467 = vpack.c.b16 %v413, %v412
        %v468 = vpack.c.b16 %v415, %v414
        %v469 = vpack.c.b16 %v417, %v416
        %v470 = vpack.c.b16 %v419, %v418
        %v471 = vpack.c.b16 %v421, %v420
        %v472 = vpack.c.b16 %v423, %v422
        %v473 = vpack.c.b16 %v425, %v424
        %v474 = vpack.c.b16 %v427, %v426
        %v475 = vpack.c.b16 %v429, %v428
        %v476 = vpack.c.b16 %v431, %v430
        %v477 = vpack.c.b16 %v433, %v432
        %v478 = vpack.c.b16 %v435, %v434
        %v479 = vpack.c.b16 %v437, %v436
        %v480 = vpack.c.b16 %v439, %v438
        %v481 = vpack.c.b16 %v441, %v440
        %v482 = vpack.c.b16 %v443, %v442
        %v483 = vpack.c.b16 %v445, %v444
        %v484 = vpack.c.b16 %v447, %v446
        %v485 = vpack.c.b16 %v449, %v448
        %v486 = vpack.c.b16 %v451, %v450
        %v487 = vpack.c.b16 %v453, %v452
        %v488 = vpack.c.b16 %v455, %v454
        %v489 = vpack.c.b16 %v457, %v456
        %522 = vmatprep.subr.bf16.mxu0 0
        %523 = vmatpush1.bf16.msra.mxu0 %v465
        %524 = vmatprep.subr.bf16.mxu0 0
        %525 = vmatpush1.bf16.msra.mxu0 %v464
        %526 = vmatprep.subr.bf16.mxu0 0
        %527 = vmatpush1.bf16.msra.mxu0 %v463
        %528 = vmatprep.subr.bf16.mxu0 0
        %529 = vmatpush1.bf16.msra.mxu0 %v462
        %530 = vmatprep.subr.bf16.mxu0 0
        %531 = vmatpush1.bf16.msra.mxu0 %v461
        %532 = vmatprep.subr.bf16.mxu0 0
        %533 = vmatpush1.bf16.msra.mxu0 %v460
        %534 = vmatprep.subr.bf16.mxu0 0
        %535 = vmatpush1.bf16.msra.mxu0 %v459
        %536 = vmatprep.subr.bf16.mxu0 0
        %537 = vmatpush1.bf16.msra.mxu0 %v458
        %538 = vmatprep.subr.bf16.mxu0 0
        %539 = vmatpush2.bf16.msra.mxu0 %v473
        %540 = vmatprep.subr.bf16.mxu0 0
        %541 = vmatpush2.bf16.msra.mxu0 %v472
        %542 = vmatprep.subr.bf16.mxu0 0
        %543 = vmatpush2.bf16.msra.mxu0 %v471
        %544 = vmatprep.subr.bf16.mxu0 0
        %545 = vmatpush2.bf16.msra.mxu0 %v470
        %546 = vmatprep.subr.bf16.mxu0 0
        %547 = vmatpush2.bf16.msra.mxu0 %v469
        %548 = vmatprep.subr.bf16.mxu0 0
        %549 = vmatpush2.bf16.msra.mxu0 %v468
        %550 = vmatprep.subr.bf16.mxu0 0
        %551 = vmatpush2.bf16.msra.mxu0 %v467
        %552 = vmatprep.subr.bf16.mxu0 0
        %553 = vmatpush2.bf16.msra.mxu0 %v466
        %554 = vmatprep.mubr.bf16.mxu0 %v263
        %555 = vmatmul.mubr.bf16.gmra.mxu0 %v262
        %v556 = vpop.f32.mrf.mxu0
        %v557 = vadd.f32 0.0, %v556
        %v558 = vpop.f32.mrf.mxu0
        %v559 = vpop.f32.mrf.mxu0
        %v560 = vadd.f32 0.0, %v559
        %v561 = vpop.f32.mrf.mxu0
        %562 = vdwg.mxu0
        %563 = vmatprep.subr.bf16.mxu0 0
        %564 = vmatpush1.bf16.msra.mxu0 %v481
        %565 = vmatprep.subr.bf16.mxu0 0
        %566 = vmatpush1.bf16.msra.mxu0 %v480
        %567 = vmatprep.subr.bf16.mxu0 0
        %568 = vmatpush1.bf16.msra.mxu0 %v479
        %569 = vmatprep.subr.bf16.mxu0 0
        %570 = vmatpush1.bf16.msra.mxu0 %v478
        %571 = vmatprep.subr.bf16.mxu0 0
        %572 = vmatpush1.bf16.msra.mxu0 %v477
        %573 = vmatprep.subr.bf16.mxu0 0
        %574 = vmatpush1.bf16.msra.mxu0 %v476
        %575 = vmatprep.subr.bf16.mxu0 0
        %576 = vmatpush1.bf16.msra.mxu0 %v475
        %577 = vmatprep.subr.bf16.mxu0 0
        %578 = vmatpush1.bf16.msra.mxu0 %v474
        %579 = vmatprep.subr.bf16.mxu0 0
        %580 = vmatpush2.bf16.msra.mxu0 %v489
        %581 = vmatprep.subr.bf16.mxu0 0
        %582 = vmatpush2.bf16.msra.mxu0 %v488
        %583 = vmatprep.subr.bf16.mxu0 0
        %584 = vmatpush2.bf16.msra.mxu0 %v487
        %585 = vmatprep.subr.bf16.mxu0 0
        %586 = vmatpush2.bf16.msra.mxu0 %v486
        %587 = vmatprep.subr.bf16.mxu0 0
        %588 = vmatpush2.bf16.msra.mxu0 %v485
        %589 = vmatprep.subr.bf16.mxu0 0
        %590 = vmatpush2.bf16.msra.mxu0 %v484
        %591 = vmatprep.subr.bf16.mxu0 0
        %592 = vmatpush2.bf16.msra.mxu0 %v483
        %593 = vmatprep.subr.bf16.mxu0 0
        %594 = vmatpush2.bf16.msra.mxu0 %v482
        %595 = vmatprep.mubr.bf16.mxu0 %v265
        %596 = vmatmul.mubr.bf16.gmra.mxu0 %v264
        %v597 = vpop.f32.mrf.mxu0
        %v598 = vadd.f32 %v557, %v597
        %v599 = vpop.f32.mrf.mxu0
        %v600 = vpop.f32.mrf.mxu0
        %v601 = vadd.f32 %v560, %v600
        %v602 = vpop.f32.mrf.mxu0
        %603 = vdwg.mxu0
        %v604 = vadd.f32 %v598, %v601
        %v605 = vrot.slane %v604, 4
        %v606 = vadd.f32 %v604, %v605
        %v607 = vrot.slane %v606, 2
        %v608 = vadd.f32 %v606, %v607
        %v609 = vrot.slane %v608, 1
        %v610 = vadd.f32 %v608, %v609
        %611 = vst [vmem:[%s249] sm:$0x1] %v610
        %v612 = vmul.f32 %v598, %v598
        %v613 = vmul.f32 %v601, %v601
        %v614 = vadd.f32 %v612, %v613
        %v615 = vrot.slane %v614, 4
        %v616 = vadd.f32 %v614, %v615
        %v617 = vrot.slane %v616, 2
        %v618 = vadd.f32 %v616, %v617
        %v619 = vrot.slane %v618, 1
        %v620 = vadd.f32 %v618, %v619
        %621 = vst [vmem:[%s252] sm:$0x1] %v620
        %v622 = vpack.c.bf16 %v601, %v598
        %v624 = vunpack.c.l.b16 %v622
        %v625 = vunpack.c.h.b16 %v622
        %v626 = vpack.c.b16 %v624, %v624
        %v627 = vpack.c.b16 %v625, %v625
        %630 = vst [vmem:[%s245] sm:$0xf] %v626
        %631 = vst [vmem:[%s245 + $0x4] sm:$0xf] %v627
        %s632 = smul.u32 2, %s20
        %p633 = scmp.lt.s32.totalorder %s632, 7
        %s634 = scalar_select %p633, %s632, 7
        %s635 = smul.addr %s634, 4
        %s636 = scalar_lea.vmem %s2, %s635
        %p637 = scmp.lt.s32.totalorder %s20, 3
        %s638 = scalar_select %p637, %s20, 3
        %s639 = scalar_lea.vmem %s3, %s638
        %p640 = scmp.lt.s32.totalorder %s20, 3
        %s641 = scalar_select %p640, %s20, 3
        %s642 = scalar_lea.vmem %s4, %s641
        // Predicated region
        $region37: #{prediction_mlp.2} parent=27 // pred_check
          %p643 = pneg %p85
        $region38: #{prediction_mlp.2} parent=27 // pred_check_branch
          %645 = sbr.rel (%p643) target = $region40
        $region39: #{prediction_mlp.2} parent=27 // pred_region
          %s646 = smul.u32 2, %s20
        $region40: #{prediction_mlp.2} parent=27 // pred_fallthru
          _
        // Predicated region
        $region41: #{prediction_mlp.2} parent=27 // pred_check
          %p647 = pneg %p111
        $region42: #{prediction_mlp.2} parent=27 // pred_check_branch
          %649 = sbr.rel (%p647) target = $region44
        $region43: #{prediction_mlp.2} parent=27 // pred_region
          _
        $region44: #{prediction_mlp.2} parent=27 // pred_fallthru
          _
        // Predicated region
        $region45: #{prediction_mlp.2} parent=27 // pred_check
          %p650 = pneg %p137
        $region46: #{prediction_mlp.2} parent=27 // pred_check_branch
          %652 = sbr.rel (%p650) target = $region48
        $region47: #{prediction_mlp.2} parent=27 // pred_region
          _
        $region48: #{prediction_mlp.2} parent=27 // pred_fallthru
          _
      $region28: #{prediction_mlp.2} parent=5 // pred_fallthru
        _
      %p653 = scmp.le.s32.totalorder 2, %s15
      // Predicated region
      $region49: #{prediction_mlp.2} parent=5 // pred_check
        %p654 = pneg %p653
      $region50: #{prediction_mlp.2} parent=5 // pred_check_branch
        %656 = sbr.rel (%p654) target = $region52
      $region51: #{prediction_mlp.2} parent=5 // pred_region
        %s657 = ssub.s32 %s15, 2
        // Predicated region
        $region53: #{prediction_mlp.2} parent=51 // pred_check
          %p658 = pneg %p91
        $region54: #{prediction_mlp.2} parent=51 // pred_check_branch
          %660 = sbr.rel (%p658) target = $region56
        $region55: #{prediction_mlp.2} parent=51 // pred_region
          %s661 = smul.u32 2, %s21
          %p662 = scmp.lt.s32.totalorder %s661, 7
          %s663 = scalar_select %p662, %s661, 7
          %s664 = smul.addr %s663, 4
          %s665 = scalar_lea.vmem %s2, %s664
        $region56: #{prediction_mlp.2} parent=51 // pred_fallthru
          _
        // Predicated region
        $region57: #{prediction_mlp.2} parent=51 // pred_check
          %p666 = pneg %p117
        $region58: #{prediction_mlp.2} parent=51 // pred_check_branch
          %668 = sbr.rel (%p666) target = $region60
        $region59: #{prediction_mlp.2} parent=51 // pred_region
          %p669 = scmp.lt.s32.totalorder %s21, 3
          %s670 = scalar_select %p669, %s21, 3
          %s671 = scalar_lea.vmem %s3, %s670
        $region60: #{prediction_mlp.2} parent=51 // pred_fallthru
          _
        // Predicated region
        $region61: #{prediction_mlp.2} parent=51 // pred_check
          %p672 = pneg %p143
        $region62: #{prediction_mlp.2} parent=51 // pred_check_branch
          %674 = sbr.rel (%p672) target = $region64
        $region63: #{prediction_mlp.2} parent=51 // pred_region
          %p675 = scmp.lt.s32.totalorder %s21, 3
          %s676 = scalar_select %p675, %s21, 3
          %s677 = scalar_lea.vmem %s4, %s676
        $region64: #{prediction_mlp.2} parent=51 // pred_fallthru
          _
      $region52: #{prediction_mlp.2} parent=5 // pred_fallthru
        _
    $region6: #{prediction_mlp.2} parent=1 // loop_footer
      %s19 = sadd.s32 1, %s15
    $region7: #{prediction_mlp.2} parent=1 // loop_footer_branch
      %14 = sbr.rel target = $region3
    $region8: #{prediction_mlp.2} parent=1 // loop_exit
      _
    %678 = vsyncpa [#allocation3], 1
    %s679 = scalar_lea.sflag [#allocation3], 1
    %680 = vsyncpa %s679, 1
    %681 = vsyncpa [#allocation5], 1

// kernel: prediction_mlp.3
$region0: #{prediction_mlp.3}
  #allocation0 [shape = 'u32[]', space=smem, size = 0x4, offset = 0x4, fixed_abs, tag = 'smem constant byte address 0x4 - core index']
  #allocation1 [shape = 'u32[144,128]{1,0:T(1,128)}', space=vmem, size = 0x12000, scoped, tag = 'internal scratch']
  %s0 = inlined_call_operand.vmem [shape: bf16[64,128], index: 0, kind: input, shape index: {}]
  %s1 = inlined_call_operand.vmem [shape: f32[1,128], index: 1, kind: input, shape index: {}]
  %s2 = inlined_call_operand.vmem [shape: f32[1,128], index: 2, kind: input, shape index: {}]
  %s3 = inlined_call_operand.vmem [shape: bf16[128,512], index: 3, kind: input, shape index: {}]
  %s4 = inlined_call_operand.vmem [shape: f32[1,512], index: 4, kind: input, shape index: {}]
  %s5 = inlined_call_operand.hbm [shape: f32[64,512], index: 5, kind: output, shape index: {}]
  %s6 = sld [smem:[#allocation0]]
  $region53: #{prediction_mlp.3} parent=0
    _
  %s8 = ssub.s32 1, %s6
  %s9 = scalar_select 0, %s8, %s6
  $region1: #{prediction_mlp.3} parent=0
    #allocation2 [shape = 'u8[65536]{0}', space=vmem, size = 0x10000, scoped, tag = 'output window, operand 0']
    #allocation3 [shape = 's32[2]{0}', space=sflag, size = 0x8, scoped, tag = 'scoped memory for prediction_mlp.3']
    %10 = vsyncpa [#allocation3], 0
    %s11 = scalar_lea.sflag [#allocation3], 1
    %12 = vsyncpa %s11, 0
    loop: start=0, step=1, limit=6
    $region2: #{prediction_mlp.3} parent=1 // loop_pre_header
      _
    $region3: #{prediction_mlp.3} parent=1 // loop_header
      %s14 = sphi 0, %s18
      %p15 = scmp.ge.s32.totalorder %s14, 6
      %s24 = sphi 0, %s26
      %s27 = sphi 0, %s24
      %s28 = sphi 0, %s27
      %s44 = sphi 0, %s28
      %s48 = sphi 0, %s48
      %s50 = sphi 0, %s48
      %s51 = sphi 0, %s50
      %s65 = sphi 0, %s51
      %s69 = sphi 0, %s69
      %s71 = sphi 0, %s69
      %s72 = sphi 0, %s71
      %s86 = sphi 0, %s72
      %s90 = sphi 0, %s90
      %s92 = sphi 0, %s90
      %s93 = sphi 0, %s92
      %s107 = sphi 0, %s93
      %s111 = sphi 0, %s111
      %s113 = sphi 0, %s111
      %s114 = sphi 0, %s113
      %s128 = sphi 0, %s114
      %s134 = sphi 0, %s136
      %s137 = sphi 0, %s134
      %s138 = sphi 0, %s137
      %s154 = sphi 0, %s138
    $region4: #{prediction_mlp.3} parent=1 // loop_header_branch
      %17 = sbr.rel (%p15) target = $region8
    $region5: #{prediction_mlp.3} parent=1 // loop_body
      %s19 = ssub.s32 %s14, 1
      %s20 = ssub.s32 %s14, 2
      %s21 = sadd.s32 %s14, 1
      %s22 = ssub.s32 %s14, %s21
      %p23 = scmp.eq.s32.totalorder %s22, 0
      %s25 = sadd.s32 %s24, 1
      %s26 = scalar_select %p23, %s24, %s25
      %p29 = pneg %p23
      %p30 = scmp.eq.s32.totalorder %s14, 3
      %p31 = por %p29, %p30
      %p32 = scmp.ne.s32.totalorder %s24, %s27
      %p33 = scmp.eq.s32.totalorder %s14, 0
      %p34 = por %p32, %p33
      %p35 = scmp.ne.s32.totalorder %s24, %s27
      %p36 = scmp.eq.s32.totalorder %s19, 3
      %p37 = por %p35, %p36
      %p38 = scmp.ne.s32.totalorder %s27, %s28
      %p39 = scmp.eq.s32.totalorder %s19, 0
      %p40 = por %p38, %p39
      %p41 = scmp.ne.s32.totalorder %s27, %s28
      %p42 = scmp.eq.s32.totalorder %s20, 3
      %p43 = por %p41, %p42
      %p45 = scmp.ne.s32.totalorder %s28, %s44
      %p46 = scmp.eq.s32.totalorder %s20, 0
      %p47 = por %p45, %p46
      %s49 = sadd.s32 %s48, 1
      %p52 = scmp.eq.s32.totalorder %s14, 3
      %p53 = scmp.ne.s32.totalorder %s48, %s50
      %p54 = scmp.eq.s32.totalorder %s14, 0
      %p55 = por %p53, %p54
      %p56 = scmp.ne.s32.totalorder %s48, %s50
      %p57 = scmp.eq.s32.totalorder %s19, 3
      %p58 = por %p56, %p57
      %p59 = scmp.ne.s32.totalorder %s50, %s51
      %p60 = scmp.eq.s32.totalorder %s19, 0
      %p61 = por %p59, %p60
      %p62 = scmp.ne.s32.totalorder %s50, %s51
      %p63 = scmp.eq.s32.totalorder %s20, 3
      %p64 = por %p62, %p63
      %p66 = scmp.ne.s32.totalorder %s51, %s65
      %p67 = scmp.eq.s32.totalorder %s20, 0
      %p68 = por %p66, %p67
      %s70 = sadd.s32 %s69, 1
      %p73 = scmp.eq.s32.totalorder %s14, 3
      %p74 = scmp.ne.s32.totalorder %s69, %s71
      %p75 = scmp.eq.s32.totalorder %s14, 0
      %p76 = por %p74, %p75
      %p77 = scmp.ne.s32.totalorder %s69, %s71
      %p78 = scmp.eq.s32.totalorder %s19, 3
      %p79 = por %p77, %p78
      %p80 = scmp.ne.s32.totalorder %s71, %s72
      %p81 = scmp.eq.s32.totalorder %s19, 0
      %p82 = por %p80, %p81
      %p83 = scmp.ne.s32.totalorder %s71, %s72
      %p84 = scmp.eq.s32.totalorder %s20, 3
      %p85 = por %p83, %p84
      %p87 = scmp.ne.s32.totalorder %s72, %s86
      %p88 = scmp.eq.s32.totalorder %s20, 0
      %p89 = por %p87, %p88
      %s91 = sadd.s32 %s90, 1
      %p94 = scmp.eq.s32.totalorder %s14, 3
      %p95 = scmp.ne.s32.totalorder %s90, %s92
      %p96 = scmp.eq.s32.totalorder %s14, 0
      %p97 = por %p95, %p96
      %p98 = scmp.ne.s32.totalorder %s90, %s92
      %p99 = scmp.eq.s32.totalorder %s19, 3
      %p100 = por %p98, %p99
      %p101 = scmp.ne.s32.totalorder %s92, %s93
      %p102 = scmp.eq.s32.totalorder %s19, 0
      %p103 = por %p101, %p102
      %p104 = scmp.ne.s32.totalorder %s92, %s93
      %p105 = scmp.eq.s32.totalorder %s20, 3
      %p106 = por %p104, %p105
      %p108 = scmp.ne.s32.totalorder %s93, %s107
      %p109 = scmp.eq.s32.totalorder %s20, 0
      %p110 = por %p108, %p109
      %s112 = sadd.s32 %s111, 1
      %p115 = scmp.eq.s32.totalorder %s14, 3
      %p116 = scmp.ne.s32.totalorder %s111, %s113
      %p117 = scmp.eq.s32.totalorder %s14, 0
      %p118 = por %p116, %p117
      %p119 = scmp.ne.s32.totalorder %s111, %s113
      %p120 = scmp.eq.s32.totalorder %s19, 3
      %p121 = por %p119, %p120
      %p122 = scmp.ne.s32.totalorder %s113, %s114
      %p123 = scmp.eq.s32.totalorder %s19, 0
      %p124 = por %p122, %p123
      %p125 = scmp.ne.s32.totalorder %s113, %s114
      %p126 = scmp.eq.s32.totalorder %s20, 3
      %p127 = por %p125, %p126
      %p129 = scmp.ne.s32.totalorder %s114, %s128
      %p130 = scmp.eq.s32.totalorder %s20, 0
      %p131 = por %p129, %p130
      %s132 = ssub.s32 %s14, %s21
      %p133 = scmp.eq.s32.totalorder %s132, 0
      %s135 = sadd.s32 %s134, 1
      %s136 = scalar_select %p133, %s134, %s135
      %p139 = pneg %p133
      %p140 = scmp.eq.s32.totalorder %s14, 3
      %p141 = por %p139, %p140
      %p142 = scmp.ne.s32.totalorder %s134, %s137
      %p143 = scmp.eq.s32.totalorder %s14, 0
      %p144 = por %p142, %p143
      %p145 = scmp.ne.s32.totalorder %s134, %s137
      %p146 = scmp.eq.s32.totalorder %s19, 3
      %p147 = por %p145, %p146
      %p148 = scmp.ne.s32.totalorder %s137, %s138
      %p149 = scmp.eq.s32.totalorder %s19, 0
      %p150 = por %p148, %p149
      %p151 = scmp.ne.s32.totalorder %s137, %s138
      %p152 = scmp.eq.s32.totalorder %s20, 3
      %p153 = por %p151, %p152
      %p155 = scmp.ne.s32.totalorder %s138, %s154
      %p156 = scmp.eq.s32.totalorder %s20, 0
      %p157 = por %p155, %p156
      %p158 = scmp.le.s32.totalorder 1, %s14
      %p159 = scmp.lt.s32.totalorder %s14, 5
      %p160 = pnand %p158, %p159
      %p161 = pneg %p160
      // Predicated region
      $region9: #{prediction_mlp.3} parent=5 // pred_check
        _
      $region10: #{prediction_mlp.3} parent=5 // pred_check_branch
        %163 = sbr.rel (%p160) target = $region12
      $region11: #{prediction_mlp.3} parent=5 // pred_region
        %s164 = ssub.s32 %s14, 1
        // Predicated region
        $region13: #{prediction_mlp.3} parent=11 // pred_check
          %p165 = pneg %p61
        $region14: #{prediction_mlp.3} parent=11 // pred_check_branch
          %167 = sbr.rel (%p165) target = $region16
        $region15: #{prediction_mlp.3} parent=11 // pred_region
          _
        $region16: #{prediction_mlp.3} parent=11 // pred_fallthru
          _
        // Predicated region
        $region17: #{prediction_mlp.3} parent=11 // pred_check
          %p168 = pneg %p82
        $region18: #{prediction_mlp.3} parent=11 // pred_check_branch
          %170 = sbr.rel (%p168) target = $region20
        $region19: #{prediction_mlp.3} parent=11 // pred_region
          _
        $region20: #{prediction_mlp.3} parent=11 // pred_fallthru
          _
        // Predicated region
        $region21: #{prediction_mlp.3} parent=11 // pred_check
          %p171 = pneg %p103
        $region22: #{prediction_mlp.3} parent=11 // pred_check_branch
          %173 = sbr.rel (%p171) target = $region24
        $region23: #{prediction_mlp.3} parent=11 // pred_region
          _
        $region24: #{prediction_mlp.3} parent=11 // pred_fallthru
          _
        // Predicated region
        $region25: #{prediction_mlp.3} parent=11 // pred_check
          %p174 = pneg %p124
        $region26: #{prediction_mlp.3} parent=11 // pred_check_branch
          %176 = sbr.rel (%p174) target = $region28
        $region27: #{prediction_mlp.3} parent=11 // pred_region
          _
        $region28: #{prediction_mlp.3} parent=11 // pred_fallthru
          _
      $region12: #{prediction_mlp.3} parent=5 // pred_fallthru
        _
      %p177 = scmp.lt.s32.totalorder %s14, 4
      // Predicated region
      $region29: #{prediction_mlp.3} parent=5 // pred_check
        %p178 = pneg %p177
      $region30: #{prediction_mlp.3} parent=5 // pred_check_branch
        %180 = sbr.rel (%p178) target = $region32
      $region31: #{prediction_mlp.3} parent=5 // pred_region
        // Predicated region
        $region33: #{prediction_mlp.3} parent=31 // pred_check
          %p181 = pneg %p34
        $region34: #{prediction_mlp.3} parent=31 // pred_check_branch
          %183 = sbr.rel (%p181) target = $region36
        $region35: #{prediction_mlp.3} parent=31 // pred_region
          %s184 = smul.u32 2, %s14
          %p185 = scmp.lt.s32.totalorder %s184, 7
          %s186 = scalar_select %p185, %s184, 7
          %s187 = smul.addr %s186, 4
          %s188 = scalar_lea.vmem %s0, %s187
          %s189 = smul.u32 2, %s14
        $region36: #{prediction_mlp.3} parent=31 // pred_fallthru
          _
      $region32: #{prediction_mlp.3} parent=5 // pred_fallthru
        _
      %p190 = scmp.le.s32.totalorder 1, %s14
      %p191 = scmp.lt.s32.totalorder %s14, 5
      %p192 = pnand %p190, %p191
      %p193 = pneg %p192
      // Predicated region
      $region37: #{prediction_mlp.3} parent=5 // pred_check
        _
      $region38: #{prediction_mlp.3} parent=5 // pred_check_branch
        %195 = sbr.rel (%p192) target = $region40
      $region39: #{prediction_mlp.3} parent=5 // pred_region
        %s196 = ssub.s32 %s14, 1
        %s197 = smul.u32 2, %s19
        %p198 = scmp.lt.s32.totalorder %s197, 7
        %s199 = scalar_select %p198, %s197, 7
        %s200 = smul.addr %s199, 4
        %s201 = scalar_lea.vmem %s0, %s200
        %p202 = pneg %p40
        %p203 = pneg %p37
        %p204 = pneg %p61
        %p205 = pneg %p58
        %p206 = pneg %p82
        %p207 = pneg %p79
        %p208 = pneg %p103
        %p209 = pneg %p100
        %p210 = pneg %p124
        %p211 = pneg %p121
        %p212 = pneg %p150
        %p213 = pneg %p147
        %s214 = sand.u32 %s137, 1
        %s215 = scalar_lea.sflag [#allocation3], %s214
        %s216 = sand.u32 %s137, 1
        %s217 = smul.addr %s216, 64
        %s218 = scalar_lea.vmem [#allocation2], %s217
        %s219 = smul.u32 2, %s19
        %p220 = scmp.lt.s32.totalorder %s219, 7
        %s221 = scalar_select %p220, %s219, 7
        %s222 = smul.addr %s221, 4
        %s223 = scalar_lea.vmem %s0, %s222
        %s224 = smul.u32 2, %s19
        %s225 = smul.u32 2, %s19
        %v227 = vld [vmem:[%s223] sm:$0xf]
        %v228 = vld [vmem:[%s223 + $0x4] sm:$0xf]
        %v229 = vunpack.c.l.bf16 %v227
        %v230 = vunpack.c.l.bf16 %v228
        %v231 = vld [vmem:[%s1] sm:$0x1]
        %v233 = vlaneseq
        %v234 = vshrl.u32 %v233, 7
        %v235 = vsub.s32 0, %v234
        %v236 = vrot.slane %v231, %v235
        %v238 = vmul.f32 %v229, %v236
        %v239 = vmul.f32 %v230, %v236
        %v240 = vld [vmem:[%s2] sm:$0x1]
        %v242 = vlaneseq
        %v243 = vshrl.u32 %v242, 7
        %v244 = vsub.s32 0, %v243
        %v245 = vrot.slane %v240, %v244
        %v247 = vadd.f32 %v238, %v245
        %v248 = vadd.f32 %v239, %v245
        %v249 = vmax.f32 %v247, 0.0
        %v250 = vmax.f32 %v248, 0.0
        %v251 = vpack.c.bf16 %v250, %v249
        %v252 = vld [vmem:[%s3] sm:$0xff]
        %v253 = vld [vmem:[%s3 + $0x8] sm:$0xff]
        %v254 = vld [vmem:[%s3 + $0x10] sm:$0xff]
        %v255 = vld [vmem:[%s3 + $0x18] sm:$0xff]
        %v256 = vld [vmem:[%s3 + $0x20] sm:$0xff]
        %v257 = vld [vmem:[%s3 + $0x28] sm:$0xff]
        %v258 = vld [vmem:[%s3 + $0x30] sm:$0xff]
        %v259 = vld [vmem:[%s3 + $0x38] sm:$0xff]
        %v260 = vld [vmem:[%s3 + $0x40] sm:$0xff]
        %v261 = vld [vmem:[%s3 + $0x48] sm:$0xff]
        %v262 = vld [vmem:[%s3 + $0x50] sm:$0xff]
        %v263 = vld [vmem:[%s3 + $0x58] sm:$0xff]
        %v264 = vld [vmem:[%s3 + $0x60] sm:$0xff]
        %v265 = vld [vmem:[%s3 + $0x68] sm:$0xff]
        %v266 = vld [vmem:[%s3 + $0x70] sm:$0xff]
        %v267 = vld [vmem:[%s3 + $0x78] sm:$0xff]
        %v268 = vld [vmem:[%s3 + $0x80] sm:$0xff]
        %v269 = vld [vmem:[%s3 + $0x88] sm:$0xff]
        %v270 = vld [vmem:[%s3 + $0x90] sm:$0xff]
        %v271 = vld [vmem:[%s3 + $0x98] sm:$0xff]
        %v272 = vld [vmem:[%s3 + $0xa0] sm:$0xff]
        %v273 = vld [vmem:[%s3 + $0xa8] sm:$0xff]
        %v274 = vld [vmem:[%s3 + $0xb0] sm:$0xff]
        %v275 = vld [vmem:[%s3 + $0xb8] sm:$0xff]
        %v276 = vld [vmem:[%s3 + $0xc0] sm:$0xff]
        %v277 = vld [vmem:[%s3 + $0xc8] sm:$0xff]
        %v278 = vld [vmem:[%s3 + $0xd0] sm:$0xff]
        %v279 = vld [vmem:[%s3 + $0xd8] sm:$0xff]
        %v280 = vld [vmem:[%s3 + $0xe0] sm:$0xff]
        %v281 = vld [vmem:[%s3 + $0xe8] sm:$0xff]
        %v282 = vld [vmem:[%s3 + $0xf0] sm:$0xff]
        %v283 = vld [vmem:[%s3 + $0xf8] sm:$0xff]
        %v284 = vld [vmem:[%s4] sm:$0xf]
        %v286 = vlaneseq
        %v287 = vshrl.u32 %v286, 7
        %v288 = vsub.s32 0, %v287
        %v289 = vrot.slane %v284, %v288
        %v290 = vlaneseq
        %v291 = vshrl.u32 %v290, 7
        %v292 = vsub.s32 1, %v291
        %v293 = vrot.slane %v284, %v292
        %v294 = vlaneseq
        %v295 = vshrl.u32 %v294, 7
        %v296 = vsub.s32 2, %v295
        %v297 = vrot.slane %v284, %v296
        %v298 = vlaneseq
        %v299 = vshrl.u32 %v298, 7
        %v300 = vsub.s32 3, %v299
        %v301 = vrot.slane %v284, %v300
        %v338 = vunpack.c.l.b16 %v252
        %v339 = vunpack.c.h.b16 %v252
        %v340 = vunpack.c.l.b16 %v253
        %v341 = vunpack.c.h.b16 %v253
        %v342 = vunpack.c.l.b16 %v254
        %v343 = vunpack.c.h.b16 %v254
        %v344 = vunpack.c.l.b16 %v255
        %v345 = vunpack.c.h.b16 %v255
        %v346 = vunpack.c.l.b16 %v256
        %v347 = vunpack.c.h.b16 %v256
        %v348 = vunpack.c.l.b16 %v257
        %v349 = vunpack.c.h.b16 %v257
        %v350 = vunpack.c.l.b16 %v258
        %v351 = vunpack.c.h.b16 %v258
        %v352 = vunpack.c.l.b16 %v259
        %v353 = vunpack.c.h.b16 %v259
        %v354 = vunpack.c.l.b16 %v260
        %v355 = vunpack.c.h.b16 %v260
        %v356 = vunpack.c.l.b16 %v261
        %v357 = vunpack.c.h.b16 %v261
        %v358 = vunpack.c.l.b16 %v262
        %v359 = vunpack.c.h.b16 %v262
        %v360 = vunpack.c.l.b16 %v263
        %v361 = vunpack.c.h.b16 %v263
        %v362 = vunpack.c.l.b16 %v264
        %v363 = vunpack.c.h.b16 %v264
        %v364 = vunpack.c.l.b16 %v265
        %v365 = vunpack.c.h.b16 %v265
        %v366 = vunpack.c.l.b16 %v266
        %v367 = vunpack.c.h.b16 %v266
        %v368 = vunpack.c.l.b16 %v267
        %v369 = vunpack.c.h.b16 %v267
        %v370 = vunpack.c.l.b16 %v268
        %v371 = vunpack.c.h.b16 %v268
        %v372 = vunpack.c.l.b16 %v269
        %v373 = vunpack.c.h.b16 %v269
        %v374 = vunpack.c.l.b16 %v270
        %v375 = vunpack.c.h.b16 %v270
        %v376 = vunpack.c.l.b16 %v271
        %v377 = vunpack.c.h.b16 %v271
        %v378 = vunpack.c.l.b16 %v272
        %v379 = vunpack.c.h.b16 %v272
        %v380 = vunpack.c.l.b16 %v273
        %v381 = vunpack.c.h.b16 %v273
        %v382 = vunpack.c.l.b16 %v274
        %v383 = vunpack.c.h.b16 %v274
        %v384 = vunpack.c.l.b16 %v275
        %v385 = vunpack.c.h.b16 %v275
        %v386 = vunpack.c.l.b16 %v276
        %v387 = vunpack.c.h.b16 %v276
        %v388 = vunpack.c.l.b16 %v277
        %v389 = vunpack.c.h.b16 %v277
        %v390 = vunpack.c.l.b16 %v278
        %v391 = vunpack.c.h.b16 %v278
        %v392 = vunpack.c.l.b16 %v279
        %v393 = vunpack.c.h.b16 %v279
        %v394 = vunpack.c.l.b16 %v280
        %v395 = vunpack.c.h.b16 %v280
        %v396 = vunpack.c.l.b16 %v281
        %v397 = vunpack.c.h.b16 %v281
        %v398 = vunpack.c.l.b16 %v282
        %v399 = vunpack.c.h.b16 %v282
        %v400 = vunpack.c.l.b16 %v283
        %v401 = vunpack.c.h.b16 %v283
        %v402 = vpack.c.b16 %v342, %v338
        %v403 = vpack.c.b16 %v343, %v339
        %v404 = vpack.c.b16 %v344, %v340
        %v405 = vpack.c.b16 %v345, %v341
        %v406 = vpack.c.b16 %v350, %v346
        %v407 = vpack.c.b16 %v351, %v347
        %v408 = vpack.c.b16 %v352, %v348
        %v409 = vpack.c.b16 %v353, %v349
        %v410 = vpack.c.b16 %v358, %v354
        %v411 = vpack.c.b16 %v359, %v355
        %v412 = vpack.c.b16 %v360, %v356
        %v413 = vpack.c.b16 %v361, %v357
        %v414 = vpack.c.b16 %v366, %v362
        %v415 = vpack.c.b16 %v367, %v363
        %v416 = vpack.c.b16 %v368, %v364
        %v417 = vpack.c.b16 %v369, %v365
        %v418 = vpack.c.b16 %v374, %v370
        %v419 = vpack.c.b16 %v375, %v371
        %v420 = vpack.c.b16 %v376, %v372
        %v421 = vpack.c.b16 %v377, %v373
        %v422 = vpack.c.b16 %v382, %v378
        %v423 = vpack.c.b16 %v383, %v379
        %v424 = vpack.c.b16 %v384, %v380
        %v425 = vpack.c.b16 %v385, %v381
        %v426 = vpack.c.b16 %v390, %v386
        %v427 = vpack.c.b16 %v391, %v387
        %v428 = vpack.c.b16 %v392, %v388
        %v429 = vpack.c.b16 %v393, %v389
        %v430 = vpack.c.b16 %v398, %v394
        %v431 = vpack.c.b16 %v399, %v395
        %v432 = vpack.c.b16 %v400, %v396
        %v433 = vpack.c.b16 %v401, %v397
        %466 = vmatprep.subr.bf16.mxu0 %v431
        %467 = vmatpush1.bf16.msra.mxu0 %v430
        %468 = vmatprep.subr.bf16.mxu0 %v427
        %469 = vmatpush1.bf16.msra.mxu0 %v426
        %470 = vmatprep.subr.bf16.mxu0 %v423
        %471 = vmatpush1.bf16.msra.mxu0 %v422
        %472 = vmatprep.subr.bf16.mxu0 %v419
        %473 = vmatpush1.bf16.msra.mxu0 %v418
        %474 = vmatprep.subr.bf16.mxu0 %v415
        %475 = vmatpush1.bf16.msra.mxu0 %v414
        %476 = vmatprep.subr.bf16.mxu0 %v411
        %477 = vmatpush1.bf16.msra.mxu0 %v410
        %478 = vmatprep.subr.bf16.mxu0 %v407
        %479 = vmatpush1.bf16.msra.mxu0 %v406
        %480 = vmatprep.subr.bf16.mxu0 %v403
        %481 = vmatpush1.bf16.msra.mxu0 %v402
        %482 = vmatprep.subr.bf16.mxu0 0
        %483 = vmatpush2.bf16.msra.mxu0 0
        %484 = vmatprep.subr.bf16.mxu0 0
        %485 = vmatpush2.bf16.msra.mxu0 0
        %486 = vmatprep.subr.bf16.mxu0 0
        %487 = vmatpush2.bf16.msra.mxu0 0
        %488 = vmatprep.subr.bf16.mxu0 0
        %489 = vmatpush2.bf16.msra.mxu0 0
        %490 = vmatprep.subr.bf16.mxu0 0
        %491 = vmatpush2.bf16.msra.mxu0 0
        %492 = vmatprep.subr.bf16.mxu0 0
        %493 = vmatpush2.bf16.msra.mxu0 0
        %494 = vmatprep.subr.bf16.mxu0 0
        %495 = vmatpush2.bf16.msra.mxu0 0
        %496 = vmatprep.subr.bf16.mxu0 0
        %497 = vmatpush2.bf16.msra.mxu0 0
        %498 = vmatprep.mubr.bf16.mxu0 0
        %499 = vmatmul.mubr.bf16.gmra.mxu0 %v251
        %v500 = vpop.f32.mrf.mxu0
        %v501 = vadd.f32 %v289, %v500
        %v502 = vpop.f32.mrf.mxu0
        %v503 = vadd.f32 %v293, %v502
        %v504 = vpop.f32.mrf.mxu0
        %v505 = vadd.f32 %v289, %v504
        %v506 = vpop.f32.mrf.mxu0
        %v507 = vadd.f32 %v293, %v506
        %508 = vdwg.mxu0
        %509 = vmatprep.subr.bf16.mxu0 %v433
        %510 = vmatpush1.bf16.msra.mxu0 %v432
        %511 = vmatprep.subr.bf16.mxu0 %v429
        %512 = vmatpush1.bf16.msra.mxu0 %v428
        %513 = vmatprep.subr.bf16.mxu0 %v425
        %514 = vmatpush1.bf16.msra.mxu0 %v424
        %515 = vmatprep.subr.bf16.mxu0 %v421
        %516 = vmatpush1.bf16.msra.mxu0 %v420
        %517 = vmatprep.subr.bf16.mxu0 %v417
        %518 = vmatpush1.bf16.msra.mxu0 %v416
        %519 = vmatprep.subr.bf16.mxu0 %v413
        %520 = vmatpush1.bf16.msra.mxu0 %v412
        %521 = vmatprep.subr.bf16.mxu0 %v409
        %522 = vmatpush1.bf16.msra.mxu0 %v408
        %523 = vmatprep.subr.bf16.mxu0 %v405
        %524 = vmatpush1.bf16.msra.mxu0 %v404
        %525 = vmatprep.subr.bf16.mxu0 0
        %526 = vmatpush2.bf16.msra.mxu0 0
        %527 = vmatprep.subr.bf16.mxu0 0
        %528 = vmatpush2.bf16.msra.mxu0 0
        %529 = vmatprep.subr.bf16.mxu0 0
        %530 = vmatpush2.bf16.msra.mxu0 0
        %531 = vmatprep.subr.bf16.mxu0 0
        %532 = vmatpush2.bf16.msra.mxu0 0
        %533 = vmatprep.subr.bf16.mxu0 0
        %534 = vmatpush2.bf16.msra.mxu0 0
        %535 = vmatprep.subr.bf16.mxu0 0
        %536 = vmatpush2.bf16.msra.mxu0 0
        %537 = vmatprep.subr.bf16.mxu0 0
        %538 = vmatpush2.bf16.msra.mxu0 0
        %539 = vmatprep.subr.bf16.mxu0 0
        %540 = vmatpush2.bf16.msra.mxu0 0
        %541 = vmatprep.mubr.bf16.mxu0 0
        %542 = vmatmul.mubr.bf16.gmra.mxu0 %v251
        %v543 = vpop.f32.mrf.mxu0
        %v544 = vadd.f32 %v297, %v543
        %v545 = vpop.f32.mrf.mxu0
        %v546 = vadd.f32 %v301, %v545
        %v547 = vpop.f32.mrf.mxu0
        %v548 = vadd.f32 %v297, %v547
        %v549 = vpop.f32.mrf.mxu0
        %v550 = vadd.f32 %v301, %v549
        %551 = vdwg.mxu0
        %552 = vst [vmem:[%s218] sm:$0xff] %v501
        %553 = vst [vmem:[%s218 + $0x8] sm:$0xff] %v503
        %554 = vst [vmem:[%s218 + $0x10] sm:$0xff] %v544
        %555 = vst [vmem:[%s218 + $0x18] sm:$0xff] %v546
        %556 = vst [vmem:[%s218 + $0x20] sm:$0xff] %v505
        %557 = vst [vmem:[%s218 + $0x28] sm:$0xff] %v507
        %558 = vst [vmem:[%s218 + $0x30] sm:$0xff] %v548
        %559 = vst [vmem:[%s218 + $0x38] sm:$0xff] %v550
        %s560 = sand.u32 %s137, 1
        %s561 = scalar_lea.sflag [#allocation3], %s560
        %s562 = sand.u32 %s137, 1
        %s563 = smul.addr %s562, 64
        %s564 = scalar_lea.vmem [#allocation2], %s563
        // Predicated region
        $region41: #{prediction_mlp.3} parent=39 // pred_check
          %p565 = pneg %p147
        $region42: #{prediction_mlp.3} parent=39 // pred_check_branch
          %567 = sbr.rel (%p565) target = $region44
        $region43: #{prediction_mlp.3} parent=39 // pred_region
          %s568 = smul.u32 2, %s19
          %s570 = ssub.s32 1024, 1024
          %571 = vsyncadd %s561, %s570
          %s572 = smul.addr %s568, 4
          %s573 = smul.addr %s572, 128
          %s574 = scalar_lea.hbm %s5, %s573
          %s575 = sshll.u32 %s564, 4
          %s576 = int_to_ptr.vmem [resolvable:$true] %s575
          %581 = dma.vmem_to_hbm [thread:$0]  %s576, 1024, %s574, %s561, 512, 512, 32
        $region44: #{prediction_mlp.3} parent=39 // pred_fallthru
          _
      $region40: #{prediction_mlp.3} parent=5 // pred_fallthru
        _
      %p582 = scmp.le.s32.totalorder 2, %s14
      // Predicated region
      $region45: #{prediction_mlp.3} parent=5 // pred_check
        %p583 = pneg %p582
      $region46: #{prediction_mlp.3} parent=5 // pred_check_branch
        %585 = sbr.rel (%p583) target = $region48
      $region47: #{prediction_mlp.3} parent=5 // pred_region
        %s586 = ssub.s32 %s14, 2
        // Predicated region
        $region49: #{prediction_mlp.3} parent=47 // pred_check
          %p587 = pneg %p153
        $region50: #{prediction_mlp.3} parent=47 // pred_check_branch
          %589 = sbr.rel (%p587) target = $region52
        $region51: #{prediction_mlp.3} parent=47 // pred_region
          %s590 = sand.u32 %s138, 1
          %s591 = scalar_lea.sflag [#allocation3], %s590
          %s592 = sand.u32 %s138, 1
          %s593 = smul.addr %s592, 64
          %s594 = scalar_lea.vmem [#allocation2], %s593
          %595 = dma.done %s591, 1024
        $region52: #{prediction_mlp.3} parent=47 // pred_fallthru
          _
      $region48: #{prediction_mlp.3} parent=5 // pred_fallthru
        _
    $region6: #{prediction_mlp.3} parent=1 // loop_footer
      %s18 = sadd.s32 1, %s14
    $region7: #{prediction_mlp.3} parent=1 // loop_footer_branch
      %13 = sbr.rel target = $region3
    $region8: #{prediction_mlp.3} parent=1 // loop_exit
      _
    %596 = vsyncpa [#allocation3], 1
    %s597 = scalar_lea.sflag [#allocation3], 1
    %598 = vsyncpa %s597, 1

// kernel: prediction_mlp.2
$region0: #{prediction_mlp.2}
  #allocation0 [shape = 'u32[]', space=smem, size = 0x4, offset = 0x4, fixed_abs, tag = 'smem constant byte address 0x4 - core index']
  #allocation1 [shape = 'u32[144,128]{1,0:T(1,128)}', space=vmem, size = 0x12000, scoped, tag = 'internal scratch']
  %s0 = inlined_call_operand.hbm [shape: f32[64,512], index: 0, kind: input, shape index: {}]
  %s1 = inlined_call_operand.hbm [shape: bf16[512,128], index: 1, kind: input, shape index: {}]
  %s2 = inlined_call_operand.vmem [shape: bf16[64,128], index: 2, kind: output, shape index: {0}]
  %s3 = inlined_call_operand.vmem [shape: f32[4,1,128], index: 3, kind: output, shape index: {1}]
  %s4 = inlined_call_operand.vmem [shape: f32[4,1,128], index: 4, kind: output, shape index: {2}]
  %5 = xla_tuple %s2, %s3, %s4
  %s6 = sld [smem:[#allocation0]]
  $region65: #{prediction_mlp.2} parent=0
    _
  %s8 = ssub.s32 1, %s6
  %s9 = scalar_select 0, %s8, %s6
  $region1: #{prediction_mlp.2} parent=0
    #allocation2 [shape = 'u8[65536]{0}', space=vmem, size = 0x10000, scoped, tag = 'input window, operand 0']
    #allocation3 [shape = 's32[2]{0}', space=sflag, size = 0x8, scoped, tag = 'scoped memory for prediction_mlp.2']
    #allocation4 [shape = 'u8[131072]{0}', space=vmem, size = 0x20000, scoped, tag = 'input window, operand 1, single buffered']
    #allocation5 [shape = 's32[1]{0}', space=sflag, size = 0x4, scoped, tag = 'scoped memory for prediction_mlp.2']
    %10 = vsyncpa [#allocation3], 0
    %s11 = scalar_lea.sflag [#allocation3], 1
    %12 = vsyncpa %s11, 0
    %13 = vsyncpa [#allocation5], 0
    loop: start=0, step=1, limit=6
    $region2: #{prediction_mlp.2} parent=1 // loop_pre_header
      _
    $region3: #{prediction_mlp.2} parent=1 // loop_header
      %s15 = sphi 0, %s19
      %p16 = scmp.ge.s32.totalorder %s15, 6
      %s25 = sphi 0, %s27
      %s28 = sphi 0, %s25
      %s29 = sphi 0, %s28
      %s45 = sphi 0, %s29
      %s49 = sphi 0, %s49
      %s51 = sphi 0, %s49
      %s52 = sphi 0, %s51
      %s66 = sphi 0, %s52
      %s72 = sphi 0, %s74
      %s75 = sphi 0, %s72
      %s76 = sphi 0, %s75
      %s92 = sphi 0, %s76
      %s98 = sphi 0, %s100
      %s101 = sphi 0, %s98
      %s102 = sphi 0, %s101
      %s118 = sphi 0, %s102
      %s124 = sphi 0, %s126
      %s127 = sphi 0, %s124
      %s128 = sphi 0, %s127
      %s144 = sphi 0, %s128
    $region4: #{prediction_mlp.2} parent=1 // loop_header_branch
      %18 = sbr.rel (%p16) target = $region8
    $region5: #{prediction_mlp.2} parent=1 // loop_body
      %s20 = ssub.s32 %s15, 1
      %s21 = ssub.s32 %s15, 2
      %s22 = sadd.s32 %s15, 1
      %s23 = ssub.s32 %s15, %s22
      %p24 = scmp.eq.s32.totalorder %s23, 0
      %s26 = sadd.s32 %s25, 1
      %s27 = scalar_select %p24, %s25, %s26
      %p30 = pneg %p24
      %p31 = scmp.eq.s32.totalorder %s15, 3
      %p32 = por %p30, %p31
      %p33 = scmp.ne.s32.totalorder %s25, %s28
      %p34 = scmp.eq.s32.totalorder %s15, 0
      %p35 = por %p33, %p34
      %p36 = scmp.ne.s32.totalorder %s25, %s28
      %p37 = scmp.eq.s32.totalorder %s20, 3
      %p38 = por %p36, %p37
      %p39 = scmp.ne.s32.totalorder %s28, %s29
      %p40 = scmp.eq.s32.totalorder %s20, 0
      %p41 = por %p39, %p40
      %p42 = scmp.ne.s32.totalorder %s28, %s29
      %p43 = scmp.eq.s32.totalorder %s21, 3
      %p44 = por %p42, %p43
      %p46 = scmp.ne.s32.totalorder %s29, %s45
      %p47 = scmp.eq.s32.totalorder %s21, 0
      %p48 = por %p46, %p47
      %s50 = sadd.s32 %s49, 1
      %p53 = scmp.eq.s32.totalorder %s15, 3
      %p54 = scmp.ne.s32.totalorder %s49, %s51
      %p55 = scmp.eq.s32.totalorder %s15, 0
      %p56 = por %p54, %p55
      %p57 = scmp.ne.s32.totalorder %s49, %s51
      %p58 = scmp.eq.s32.totalorder %s20, 3
      %p59 = por %p57, %p58
      %p60 = scmp.ne.s32.totalorder %s51, %s52
      %p61 = scmp.eq.s32.totalorder %s20, 0
      %p62 = por %p60, %p61
      %p63 = scmp.ne.s32.totalorder %s51, %s52
      %p64 = scmp.eq.s32.totalorder %s21, 3
      %p65 = por %p63, %p64
      %p67 = scmp.ne.s32.totalorder %s52, %s66
      %p68 = scmp.eq.s32.totalorder %s21, 0
      %p69 = por %p67, %p68
      %s70 = ssub.s32 %s15, %s22
      %p71 = scmp.eq.s32.totalorder %s70, 0
      %s73 = sadd.s32 %s72, 1
      %s74 = scalar_select %p71, %s72, %s73
      %p77 = pneg %p71
      %p78 = scmp.eq.s32.totalorder %s15, 3
      %p79 = por %p77, %p78
      %p80 = scmp.ne.s32.totalorder %s72, %s75
      %p81 = scmp.eq.s32.totalorder %s15, 0
      %p82 = por %p80, %p81
      %p83 = scmp.ne.s32.totalorder %s72, %s75
      %p84 = scmp.eq.s32.totalorder %s20, 3
      %p85 = por %p83, %p84
      %p86 = scmp.ne.s32.totalorder %s75, %s76
      %p87 = scmp.eq.s32.totalorder %s20, 0
      %p88 = por %p86, %p87
      %p89 = scmp.ne.s32.totalorder %s75, %s76
      %p90 = scmp.eq.s32.totalorder %s21, 3
      %p91 = por %p89, %p90
      %p93 = scmp.ne.s32.totalorder %s76, %s92
      %p94 = scmp.eq.s32.totalorder %s21, 0
      %p95 = por %p93, %p94
      %s96 = ssub.s32 %s15, %s22
      %p97 = scmp.eq.s32.totalorder %s96, 0
      %s99 = sadd.s32 %s98, 1
      %s100 = scalar_select %p97, %s98, %s99
      %p103 = pneg %p97
      %p104 = scmp.eq.s32.totalorder %s15, 3
      %p105 = por %p103, %p104
      %p106 = scmp.ne.s32.totalorder %s98, %s101
      %p107 = scmp.eq.s32.totalorder %s15, 0
      %p108 = por %p106, %p107
      %p109 = scmp.ne.s32.totalorder %s98, %s101
      %p110 = scmp.eq.s32.totalorder %s20, 3
      %p111 = por %p109, %p110
      %p112 = scmp.ne.s32.totalorder %s101, %s102
      %p113 = scmp.eq.s32.totalorder %s20, 0
      %p114 = por %p112, %p113
      %p115 = scmp.ne.s32.totalorder %s101, %s102
      %p116 = scmp.eq.s32.totalorder %s21, 3
      %p117 = por %p115, %p116
      %p119 = scmp.ne.s32.totalorder %s102, %s118
      %p120 = scmp.eq.s32.totalorder %s21, 0
      %p121 = por %p119, %p120
      %s122 = ssub.s32 %s15, %s22
      %p123 = scmp.eq.s32.totalorder %s122, 0
      %s125 = sadd.s32 %s124, 1
      %s126 = scalar_select %p123, %s124, %s125
      %p129 = pneg %p123
      %p130 = scmp.eq.s32.totalorder %s15, 3
      %p131 = por %p129, %p130
      %p132 = scmp.ne.s32.totalorder %s124, %s127
      %p133 = scmp.eq.s32.totalorder %s15, 0
      %p134 = por %p132, %p133
      %p135 = scmp.ne.s32.totalorder %s124, %s127
      %p136 = scmp.eq.s32.totalorder %s20, 3
      %p137 = por %p135, %p136
      %p138 = scmp.ne.s32.totalorder %s127, %s128
      %p139 = scmp.eq.s32.totalorder %s20, 0
      %p140 = por %p138, %p139
      %p141 = scmp.ne.s32.totalorder %s127, %s128
      %p142 = scmp.eq.s32.totalorder %s21, 3
      %p143 = por %p141, %p142
      %p145 = scmp.ne.s32.totalorder %s128, %s144
      %p146 = scmp.eq.s32.totalorder %s21, 0
      %p147 = por %p145, %p146
      %p148 = scmp.le.s32.totalorder 1, %s15
      %p149 = scmp.lt.s32.totalorder %s15, 5
      %p150 = pnand %p148, %p149
      %p151 = pneg %p150
      // Predicated region
      $region9: #{prediction_mlp.2} parent=5 // pred_check
        _
      $region10: #{prediction_mlp.2} parent=5 // pred_check_branch
        %153 = sbr.rel (%p150) target = $region12
      $region11: #{prediction_mlp.2} parent=5 // pred_region
        %s154 = ssub.s32 %s15, 1
        // Predicated region
        $region13: #{prediction_mlp.2} parent=11 // pred_check
          %p155 = pneg %p62
        $region14: #{prediction_mlp.2} parent=11 // pred_check_branch
          %157 = sbr.rel (%p155) target = $region16
        $region15: #{prediction_mlp.2} parent=11 // pred_region
          %s159 = ssub.s32 4096, 4096
          %160 = vsyncadd [#allocation5], %s159
          %s161 = sshll.u32 [#allocation4], 4
          %s162 = int_to_ptr.vmem [resolvable:$true] %s161
          %167 = dma.hbm_to_vmem [thread:$0]  %s1, 4096, %s162, [#allocation5], 64, 64, 4
        $region16: #{prediction_mlp.2} parent=11 // pred_fallthru
          _
      $region12: #{prediction_mlp.2} parent=5 // pred_fallthru
        _
      %p168 = scmp.lt.s32.totalorder %s15, 4
      // Predicated region
      $region17: #{prediction_mlp.2} parent=5 // pred_check
        %p169 = pneg %p168
      $region18: #{prediction_mlp.2} parent=5 // pred_check_branch
        %171 = sbr.rel (%p169) target = $region20
      $region19: #{prediction_mlp.2} parent=5 // pred_region
        // Predicated region
        $region21: #{prediction_mlp.2} parent=19 // pred_check
          %p172 = pneg %p35
        $region22: #{prediction_mlp.2} parent=19 // pred_check_branch
          %174 = sbr.rel (%p172) target = $region24
        $region23: #{prediction_mlp.2} parent=19 // pred_region
          %s175 = sand.u32 %s25, 1
          %s176 = scalar_lea.sflag [#allocation3], %s175
          %s177 = sand.u32 %s25, 1
          %s178 = smul.addr %s177, 64
          %s179 = scalar_lea.vmem [#allocation2], %s178
          %s180 = smul.u32 2, %s15
          %s182 = ssub.s32 1024, 1024
          %183 = vsyncadd %s176, %s182
          %s184 = smul.addr %s180, 4
          %s185 = smul.addr %s184, 128
          %s186 = scalar_lea.hbm %s0, %s185
          %s187 = sshll.u32 %s179, 4
          %s188 = int_to_ptr.vmem [resolvable:$true] %s187
          %193 = dma.hbm_to_vmem [thread:$0]  %s186, 1024, %s188, %s176, 512, 512, 32
        $region24: #{prediction_mlp.2} parent=19 // pred_fallthru
          _
      $region20: #{prediction_mlp.2} parent=5 // pred_fallthru
        _
      %p194 = scmp.le.s32.totalorder 1, %s15
      %p195 = scmp.lt.s32.totalorder %s15, 5
      %p196 = pnand %p194, %p195
      %p197 = pneg %p196
      // Predicated region
      $region25: #{prediction_mlp.2} parent=5 // pred_check
        _
      $region26: #{prediction_mlp.2} parent=5 // pred_check_branch
        %199 = sbr.rel (%p196) target = $region28
      $region27: #{prediction_mlp.2} parent=5 // pred_region
        %s200 = ssub.s32 %s15, 1
        %s201 = sand.u32 %s28, 1
        %s202 = scalar_lea.sflag [#allocation3], %s201
        %s203 = sand.u32 %s28, 1
        %s204 = smul.addr %s203, 64
        %s205 = scalar_lea.vmem [#allocation2], %s204
        // Predicated region
        $region29: #{prediction_mlp.2} parent=27 // pred_check
          %p206 = pneg %p41
        $region30: #{prediction_mlp.2} parent=27 // pred_check_branch
          %208 = sbr.rel (%p206) target = $region32
        $region31: #{prediction_mlp.2} parent=27 // pred_region
          %209 = dma.done %s202, 1024
        $region32: #{prediction_mlp.2} parent=27 // pred_fallthru
          _
        // Predicated region
        $region33: #{prediction_mlp.2} parent=27 // pred_check
          %p210 = pneg %p62
        $region34: #{prediction_mlp.2} parent=27 // pred_check_branch
          %212 = sbr.rel (%p210) target = $region36
        $region35: #{prediction_mlp.2} parent=27 // pred_region
          %213 = dma.done [#allocation5], 4096
        $region36: #{prediction_mlp.2} parent=27 // pred_fallthru
          _
        %s214 = sand.u32 %s28, 1
        %s215 = scalar_lea.sflag [#allocation3], %s214
        %s216 = sand.u32 %s28, 1
        %s217 = smul.addr %s216, 64
        %s218 = scalar_lea.vmem [#allocation2], %s217
        %p219 = pneg %p41
        %p220 = pneg %p38
        %p221 = pneg %p62
        %p222 = pneg %p59
        %p223 = pneg %p88
        %p224 = pneg %p85
        %s225 = smul.u32 2, %s20
        %p226 = scmp.lt.s32.totalorder %s225, 7
        %s227 = scalar_select %p226, %s225, 7
        %s228 = smul.addr %s227, 4
        %s229 = scalar_lea.vmem %s2, %s228
        %p230 = pneg %p114
        %p231 = pneg %p111
        %p232 = scmp.lt.s32.totalorder %s20, 3
        %s233 = scalar_select %p232, %s20, 3
        %s234 = scalar_lea.vmem %s3, %s233
        %p235 = pneg %p140
        %p236 = pneg %p137
        %p237 = scmp.lt.s32.totalorder %s20, 3
        %s238 = scalar_select %p237, %s20, 3
        %s239 = scalar_lea.vmem %s4, %s238
        %s240 = smul.u32 2, %s20
        %s241 = smul.u32 2, %s20
        %p242 = scmp.lt.s32.totalorder %s241, 7
        %s243 = scalar_select %p242, %s241, 7
        %s244 = smul.addr %s243, 4
        %s245 = scalar_lea.vmem %s2, %s244
        %s246 = smul.u32 2, %s20
        %p247 = scmp.lt.s32.totalorder %s20, 3
        %s248 = scalar_select %p247, %s20, 3
        %s249 = scalar_lea.vmem %s3, %s248
        %p250 = scmp.lt.s32.totalorder %s20, 3
        %s251 = scalar_select %p250, %s20, 3
        %s252 = scalar_lea.vmem %s4, %s251
        %v254 = vld [vmem:[%s205] sm:$0xff]
        %v255 = vld [vmem:[%s205 + $0x8] sm:$0xff]
        %v256 = vld [vmem:[%s205 + $0x10] sm:$0xff]
        %v257 = vld [vmem:[%s205 + $0x18] sm:$0xff]
        %v258 = vld [vmem:[%s205 + $0x20] sm:$0xff]
        %v259 = vld [vmem:[%s205 + $0x28] sm:$0xff]
        %v260 = vld [vmem:[%s205 + $0x30] sm:$0xff]
        %v261 = vld [vmem:[%s205 + $0x38] sm:$0xff]
        %v262 = vpack.c.bf16 %v258, %v254
        %v263 = vpack.c.bf16 %v259, %v255
        %v264 = vpack.c.bf16 %v260, %v256
        %v265 = vpack.c.bf16 %v261, %v257
        %v266 = vld [vmem:[#allocation4] sm:$0xf]
        %v267 = vld [vmem:[#allocation4 + $0x4] sm:$0xf]
        %v268 = vld [vmem:[#allocation4 + $0x8] sm:$0xf]
        %v269 = vld [vmem:[#allocation4 + $0xc] sm:$0xf]
        %v270 = vld [vmem:[#allocation4 + $0x10] sm:$0xf]
        %v271 = vld [vmem:[#allocation4 + $0x14] sm:$0xf]
        %v272 = vld [vmem:[#allocation4 + $0x18] sm:$0xf]
        %v273 = vld [vmem:[#allocation4 + $0x1c] sm:$0xf]
        %v274 = vld [vmem:[#allocation4 + $0x20] sm:$0xf]
        %v275 = vld [vmem:[#allocation4 + $0x24] sm:$0xf]
        %v276 = vld [vmem:[#allocation4 + $0x28] sm:$0xf]
        %v277 = vld [vmem:[#allocation4 + $0x2c] sm:$0xf]
        %v278 = vld [vmem:[#allocation4 + $0x30] sm:$0xf]
        %v279 = vld [vmem:[#allocation4 + $0x34] sm:$0xf]
        %v280 = vld [vmem:[#allocation4 + $0x38] sm:$0xf]
        %v281 = vld [vmem:[#allocation4 + $0x3c] sm:$0xf]
        %v282 = vld [vmem:[#allocation4 + $0x40] sm:$0xf]
        %v283 = vld [vmem:[#allocation4 + $0x44] sm:$0xf]
        %v284 = vld [vmem:[#allocation4 + $0x48] sm:$0xf]
        %v285 = vld [vmem:[#allocation4 + $0x4c] sm:$0xf]
        %v286 = vld [vmem:[#allocation4 + $0x50] sm:$0xf]
        %v287 = vld [vmem:[#allocation4 + $0x54] sm:$0xf]
        %v288 = vld [vmem:[#allocation4 + $0x58] sm:$0xf]
        %v289 = vld [vmem:[#allocation4 + $0x5c] sm:$0xf]
        %v290 = vld [vmem:[#allocation4 + $0x60] sm:$0xf]
        %v291 = vld [vmem:[#allocation4 + $0x64] sm:$0xf]
        %v292 = vld [vmem:[#allocation4 + $0x68] sm:$0xf]
        %v293 = vld [vmem:[#allocation4 + $0x6c] sm:$0xf]
        %v294 = vld [vmem:[#allocation4 + $0x70] sm:$0xf]
        %v295 = vld [vmem:[#allocation4 + $0x74] sm:$0xf]
        %v296 = vld [vmem:[#allocation4 + $0x78] sm:$0xf]
        %v297 = vld [vmem:[#allocation4 + $0x7c] sm:$0xf]
        %v298 = vld [vmem:[#allocation4 + $0x80] sm:$0xf]
        %v299 = vld [vmem:[#allocation4 + $0x84] sm:$0xf]
        %v300 = vld [vmem:[#allocation4 + $0x88] sm:$0xf]
        %v301 = vld [vmem:[#allocation4 + $0x8c] sm:$0xf]
        %v302 = vld [vmem:[#allocation4 + $0x90] sm:$0xf]
        %v303 = vld [vmem:[#allocation4 + $0x94] sm:$0xf]
        %v304 = vld [vmem:[#allocation4 + $0x98] sm:$0xf]
        %v305 = vld [vmem:[#allocation4 + $0x9c] sm:$0xf]
        %v306 = vld [vmem:[#allocation4 + $0xa0] sm:$0xf]
        %v307 = vld [vmem:[#allocation4 + $0xa4] sm:$0xf]
        %v308 = vld [vmem:[#allocation4 + $0xa8] sm:$0xf]
        %v309 = vld [vmem:[#allocation4 + $0xac] sm:$0xf]
        %v310 = vld [vmem:[#allocation4 + $0xb0] sm:$0xf]
        %v311 = vld [vmem:[#allocation4 + $0xb4] sm:$0xf]
        %v312 = vld [vmem:[#allocation4 + $0xb8] sm:$0xf]
        %v313 = vld [vmem:[#allocation4 + $0xbc] sm:$0xf]
        %v314 = vld [vmem:[#allocation4 + $0xc0] sm:$0xf]
        %v315 = vld [vmem:[#allocation4 + $0xc4] sm:$0xf]
        %v316 = vld [vmem:[#allocation4 + $0xc8] sm:$0xf]
        %v317 = vld [vmem:[#allocation4 + $0xcc] sm:$0xf]
        %v318 = vld [vmem:[#allocation4 + $0xd0] sm:$0xf]
        %v319 = vld [vmem:[#allocation4 + $0xd4] sm:$0xf]
        %v320 = vld [vmem:[#allocation4 + $0xd8] sm:$0xf]
        %v321 = vld [vmem:[#allocation4 + $0xdc] sm:$0xf]
        %v322 = vld [vmem:[#allocation4 + $0xe0] sm:$0xf]
        %v323 = vld [vmem:[#allocation4 + $0xe4] sm:$0xf]
        %v324 = vld [vmem:[#allocation4 + $0xe8] sm:$0xf]
        %v325 = vld [vmem:[#allocation4 + $0xec] sm:$0xf]
        %v326 = vld [vmem:[#allocation4 + $0xf0] sm:$0xf]
        %v327 = vld [vmem:[#allocation4 + $0xf4] sm:$0xf]
        %v328 = vld [vmem:[#allocation4 + $0xf8] sm:$0xf]
        %v329 = vld [vmem:[#allocation4 + $0xfc] sm:$0xf]
        %v394 = vunpack.c.l.b16 %v266
        %v395 = vunpack.c.l.b16 %v267
        %v396 = vunpack.c.l.b16 %v268
        %v397 = vunpack.c.l.b16 %v269
        %v398 = vunpack.c.l.b16 %v270
        %v399 = vunpack.c.l.b16 %v271
        %v400 = vunpack.c.l.b16 %v272
        %v401 = vunpack.c.l.b16 %v273
        %v402 = vunpack.c.l.b16 %v274
        %v403 = vunpack.c.l.b16 %v275
        %v404 = vunpack.c.l.b16 %v276
        %v405 = vunpack.c.l.b16 %v277
        %v406 = vunpack.c.l.b16 %v278
        %v407 = vunpack.c.l.b16 %v279
        %v408 = vunpack.c.l.b16 %v280
        %v409 = vunpack.c.l.b16 %v281
        %v410 = vunpack.c.l.b16 %v282
        %v411 = vunpack.c.l.b16 %v283
        %v412 = vunpack.c.l.b16 %v284
        %v413 = vunpack.c.l.b16 %v285
        %v414 = vunpack.c.l.b16 %v286
        %v415 = vunpack.c.l.b16 %v287
        %v416 = vunpack.c.l.b16 %v288
        %v417 = vunpack.c.l.b16 %v289
        %v418 = vunpack.c.l.b16 %v290
        %v419 = vunpack.c.l.b16 %v291
        %v420 = vunpack.c.l.b16 %v292
        %v421 = vunpack.c.l.b16 %v293
        %v422 = vunpack.c.l.b16 %v294
        %v423 = vunpack.c.l.b16 %v295
        %v424 = vunpack.c.l.b16 %v296
        %v425 = vunpack.c.l.b16 %v297
        %v426 = vunpack.c.l.b16 %v298
        %v427 = vunpack.c.l.b16 %v299
        %v428 = vunpack.c.l.b16 %v300
        %v429 = vunpack.c.l.b16 %v301
        %v430 = vunpack.c.l.b16 %v302
        %v431 = vunpack.c.l.b16 %v303
        %v432 = vunpack.c.l.b16 %v304
        %v433 = vunpack.c.l.b16 %v305
        %v434 = vunpack.c.l.b16 %v306
        %v435 = vunpack.c.l.b16 %v307
        %v436 = vunpack.c.l.b16 %v308
        %v437 = vunpack.c.l.b16 %v309
        %v438 = vunpack.c.l.b16 %v310
        %v439 = vunpack.c.l.b16 %v311
        %v440 = vunpack.c.l.b16 %v312
        %v441 = vunpack.c.l.b16 %v313
        %v442 = vunpack.c.l.b16 %v314
        %v443 = vunpack.c.l.b16 %v315
        %v444 = vunpack.c.l.b16 %v316
        %v445 = vunpack.c.l.b16 %v317
        %v446 = vunpack.c.l.b16 %v318
        %v447 = vunpack.c.l.b16 %v319
        %v448 = vunpack.c.l.b16 %v320
        %v449 = vunpack.c.l.b16 %v321
        %v450 = vunpack.c.l.b16 %v322
        %v451 = vunpack.c.l.b16 %v323
        %v452 = vunpack.c.l.b16 %v324
        %v453 = vunpack.c.l.b16 %v325
        %v454 = vunpack.c.l.b16 %v326
        %v455 = vunpack.c.l.b16 %v327
        %v456 = vunpack.c.l.b16 %v328
        %v457 = vunpack.c.l.b16 %v329
        %v458 = vpack.c.b16 %v395, %v394
        %v459 = vpack.c.b16 %v397, %v396
        %v460 = vpack.c.b16 %v399, %v398
        %v461 = vpack.c.b16 %v401, %v400
        %v462 = vpack.c.b16 %v403, %v402
        %v463 = vpack.c.b16 %v405, %v404
        %v464 = vpack.c.b16 %v407, %v406
        %v465 = vpack.c.b16 %v409, %v408
        %v466 = vpack.c.b16 %v411, %v410
        %v467 = vpack.c.b16 %v413, %v412
        %v468 = vpack.c.b16 %v415, %v414
        %v469 = vpack.c.b16 %v417, %v416
        %v470 = vpack.c.b16 %v419, %v418
        %v471 = vpack.c.b16 %v421, %v420
        %v472 = vpack.c.b16 %v423, %v422
        %v473 = vpack.c.b16 %v425, %v424
        %v474 = vpack.c.b16 %v427, %v426
        %v475 = vpack.c.b16 %v429, %v428
        %v476 = vpack.c.b16 %v431, %v430
        %v477 = vpack.c.b16 %v433, %v432
        %v478 = vpack.c.b16 %v435, %v434
        %v479 = vpack.c.b16 %v437, %v436
        %v480 = vpack.c.b16 %v439, %v438
        %v481 = vpack.c.b16 %v441, %v440
        %v482 = vpack.c.b16 %v443, %v442
        %v483 = vpack.c.b16 %v445, %v444
        %v484 = vpack.c.b16 %v447, %v446
        %v485 = vpack.c.b16 %v449, %v448
        %v486 = vpack.c.b16 %v451, %v450
        %v487 = vpack.c.b16 %v453, %v452
        %v488 = vpack.c.b16 %v455, %v454
        %v489 = vpack.c.b16 %v457, %v456
        %522 = vmatprep.subr.bf16.mxu0 0
        %523 = vmatpush1.bf16.msra.mxu0 %v465
        %524 = vmatprep.subr.bf16.mxu0 0
        %525 = vmatpush1.bf16.msra.mxu0 %v464
        %526 = vmatprep.subr.bf16.mxu0 0
        %527 = vmatpush1.bf16.msra.mxu0 %v463
        %528 = vmatprep.subr.bf16.mxu0 0
        %529 = vmatpush1.bf16.msra.mxu0 %v462
        %530 = vmatprep.subr.bf16.mxu0 0
        %531 = vmatpush1.bf16.msra.mxu0 %v461
        %532 = vmatprep.subr.bf16.mxu0 0
        %533 = vmatpush1.bf16.msra.mxu0 %v460
        %534 = vmatprep.subr.bf16.mxu0 0
        %535 = vmatpush1.bf16.msra.mxu0 %v459
        %536 = vmatprep.subr.bf16.mxu0 0
        %537 = vmatpush1.bf16.msra.mxu0 %v458
        %538 = vmatprep.subr.bf16.mxu0 0
        %539 = vmatpush2.bf16.msra.mxu0 %v473
        %540 = vmatprep.subr.bf16.mxu0 0
        %541 = vmatpush2.bf16.msra.mxu0 %v472
        %542 = vmatprep.subr.bf16.mxu0 0
        %543 = vmatpush2.bf16.msra.mxu0 %v471
        %544 = vmatprep.subr.bf16.mxu0 0
        %545 = vmatpush2.bf16.msra.mxu0 %v470
        %546 = vmatprep.subr.bf16.mxu0 0
        %547 = vmatpush2.bf16.msra.mxu0 %v469
        %548 = vmatprep.subr.bf16.mxu0 0
        %549 = vmatpush2.bf16.msra.mxu0 %v468
        %550 = vmatprep.subr.bf16.mxu0 0
        %551 = vmatpush2.bf16.msra.mxu0 %v467
        %552 = vmatprep.subr.bf16.mxu0 0
        %553 = vmatpush2.bf16.msra.mxu0 %v466
        %554 = vmatprep.mubr.bf16.mxu0 %v263
        %555 = vmatmul.mubr.bf16.gmra.mxu0 %v262
        %v556 = vpop.f32.mrf.mxu0
        %v557 = vadd.f32 0.0, %v556
        %v558 = vpop.f32.mrf.mxu0
        %v559 = vpop.f32.mrf.mxu0
        %v560 = vadd.f32 0.0, %v559
        %v561 = vpop.f32.mrf.mxu0
        %562 = vdwg.mxu0
        %563 = vmatprep.subr.bf16.mxu0 0
        %564 = vmatpush1.bf16.msra.mxu0 %v481
        %565 = vmatprep.subr.bf16.mxu0 0
        %566 = vmatpush1.bf16.msra.mxu0 %v480
        %567 = vmatprep.subr.bf16.mxu0 0
        %568 = vmatpush1.bf16.msra.mxu0 %v479
        %569 = vmatprep.subr.bf16.mxu0 0
        %570 = vmatpush1.bf16.msra.mxu0 %v478
        %571 = vmatprep.subr.bf16.mxu0 0
        %572 = vmatpush1.bf16.msra.mxu0 %v477
        %573 = vmatprep.subr.bf16.mxu0 0
        %574 = vmatpush1.bf16.msra.mxu0 %v476
        %575 = vmatprep.subr.bf16.mxu0 0
        %576 = vmatpush1.bf16.msra.mxu0 %v475
        %577 = vmatprep.subr.bf16.mxu0 0
        %578 = vmatpush1.bf16.msra.mxu0 %v474
        %579 = vmatprep.subr.bf16.mxu0 0
        %580 = vmatpush2.bf16.msra.mxu0 %v489
        %581 = vmatprep.subr.bf16.mxu0 0
        %582 = vmatpush2.bf16.msra.mxu0 %v488
        %583 = vmatprep.subr.bf16.mxu0 0
        %584 = vmatpush2.bf16.msra.mxu0 %v487
        %585 = vmatprep.subr.bf16.mxu0 0
        %586 = vmatpush2.bf16.msra.mxu0 %v486
        %587 = vmatprep.subr.bf16.mxu0 0
        %588 = vmatpush2.bf16.msra.mxu0 %v485
        %589 = vmatprep.subr.bf16.mxu0 0
        %590 = vmatpush2.bf16.msra.mxu0 %v484
        %591 = vmatprep.subr.bf16.mxu0 0
        %592 = vmatpush2.bf16.msra.mxu0 %v483
        %593 = vmatprep.subr.bf16.mxu0 0
        %594 = vmatpush2.bf16.msra.mxu0 %v482
        %595 = vmatprep.mubr.bf16.mxu0 %v265
        %596 = vmatmul.mubr.bf16.gmra.mxu0 %v264
        %v597 = vpop.f32.mrf.mxu0
        %v598 = vadd.f32 %v557, %v597
        %v599 = vpop.f32.mrf.mxu0
        %v600 = vpop.f32.mrf.mxu0
        %v601 = vadd.f32 %v560, %v600
        %v602 = vpop.f32.mrf.mxu0
        %603 = vdwg.mxu0
        %v604 = vadd.f32 %v598, %v601
        %v605 = vrot.slane %v604, 4
        %v606 = vadd.f32 %v604, %v605
        %v607 = vrot.slane %v606, 2
        %v608 = vadd.f32 %v606, %v607
        %v609 = vrot.slane %v608, 1
        %v610 = vadd.f32 %v608, %v609
        %611 = vst [vmem:[%s249] sm:$0x1] %v610
        %v612 = vmul.f32 %v598, %v598
        %v613 = vmul.f32 %v601, %v601
        %v614 = vadd.f32 %v612, %v613
        %v615 = vrot.slane %v614, 4
        %v616 = vadd.f32 %v614, %v615
        %v617 = vrot.slane %v616, 2
        %v618 = vadd.f32 %v616, %v617
        %v619 = vrot.slane %v618, 1
        %v620 = vadd.f32 %v618, %v619
        %621 = vst [vmem:[%s252] sm:$0x1] %v620
        %v622 = vpack.c.bf16 %v601, %v598
        %v624 = vunpack.c.l.b16 %v622
        %v625 = vunpack.c.h.b16 %v622
        %v626 = vpack.c.b16 %v624, %v624
        %v627 = vpack.c.b16 %v625, %v625
        %630 = vst [vmem:[%s245] sm:$0xf] %v626
        %631 = vst [vmem:[%s245 + $0x4] sm:$0xf] %v627
        %s632 = smul.u32 2, %s20
        %p633 = scmp.lt.s32.totalorder %s632, 7
        %s634 = scalar_select %p633, %s632, 7
        %s635 = smul.addr %s634, 4
        %s636 = scalar_lea.vmem %s2, %s635
        %p637 = scmp.lt.s32.totalorder %s20, 3
        %s638 = scalar_select %p637, %s20, 3
        %s639 = scalar_lea.vmem %s3, %s638
        %p640 = scmp.lt.s32.totalorder %s20, 3
        %s641 = scalar_select %p640, %s20, 3
        %s642 = scalar_lea.vmem %s4, %s641
        // Predicated region
        $region37: #{prediction_mlp.2} parent=27 // pred_check
          %p643 = pneg %p85
        $region38: #{prediction_mlp.2} parent=27 // pred_check_branch
          %645 = sbr.rel (%p643) target = $region40
        $region39: #{prediction_mlp.2} parent=27 // pred_region
          %s646 = smul.u32 2, %s20
        $region40: #{prediction_mlp.2} parent=27 // pred_fallthru
          _
        // Predicated region
        $region41: #{prediction_mlp.2} parent=27 // pred_check
          %p647 = pneg %p111
        $region42: #{prediction_mlp.2} parent=27 // pred_check_branch
          %649 = sbr.rel (%p647) target = $region44
        $region43: #{prediction_mlp.2} parent=27 // pred_region
          _
        $region44: #{prediction_mlp.2} parent=27 // pred_fallthru
          _
        // Predicated region
        $region45: #{prediction_mlp.2} parent=27 // pred_check
          %p650 = pneg %p137
        $region46: #{prediction_mlp.2} parent=27 // pred_check_branch
          %652 = sbr.rel (%p650) target = $region48
        $region47: #{prediction_mlp.2} parent=27 // pred_region
          _
        $region48: #{prediction_mlp.2} parent=27 // pred_fallthru
          _
      $region28: #{prediction_mlp.2} parent=5 // pred_fallthru
        _
      %p653 = scmp.le.s32.totalorder 2, %s15
      // Predicated region
      $region49: #{prediction_mlp.2} parent=5 // pred_check
        %p654 = pneg %p653
      $region50: #{prediction_mlp.2} parent=5 // pred_check_branch
        %656 = sbr.rel (%p654) target = $region52
      $region51: #{prediction_mlp.2} parent=5 // pred_region
        %s657 = ssub.s32 %s15, 2
        // Predicated region
        $region53: #{prediction_mlp.2} parent=51 // pred_check
          %p658 = pneg %p91
        $region54: #{prediction_mlp.2} parent=51 // pred_check_branch
          %660 = sbr.rel (%p658) target = $region56
        $region55: #{prediction_mlp.2} parent=51 // pred_region
          %s661 = smul.u32 2, %s21
          %p662 = scmp.lt.s32.totalorder %s661, 7
          %s663 = scalar_select %p662, %s661, 7
          %s664 = smul.addr %s663, 4
          %s665 = scalar_lea.vmem %s2, %s664
        $region56: #{prediction_mlp.2} parent=51 // pred_fallthru
          _
        // Predicated region
        $region57: #{prediction_mlp.2} parent=51 // pred_check
          %p666 = pneg %p117
        $region58: #{prediction_mlp.2} parent=51 // pred_check_branch
          %668 = sbr.rel (%p666) target = $region60
        $region59: #{prediction_mlp.2} parent=51 // pred_region
          %p669 = scmp.lt.s32.totalorder %s21, 3
          %s670 = scalar_select %p669, %s21, 3
          %s671 = scalar_lea.vmem %s3, %s670
        $region60: #{prediction_mlp.2} parent=51 // pred_fallthru
          _
        // Predicated region
        $region61: #{prediction_mlp.2} parent=51 // pred_check
          %p672 = pneg %p143
        $region62: #{prediction_mlp.2} parent=51 // pred_check_branch
          %674 = sbr.rel (%p672) target = $region64
        $region63: #{prediction_mlp.2} parent=51 // pred_region
          %p675 = scmp.lt.s32.totalorder %s21, 3
          %s676 = scalar_select %p675, %s21, 3
          %s677 = scalar_lea.vmem %s4, %s676
        $region64: #{prediction_mlp.2} parent=51 // pred_fallthru
          _
      $region52: #{prediction_mlp.2} parent=5 // pred_fallthru
        _
    $region6: #{prediction_mlp.2} parent=1 // loop_footer
      %s19 = sadd.s32 1, %s15
    $region7: #{prediction_mlp.2} parent=1 // loop_footer_branch
      %14 = sbr.rel target = $region3
    $region8: #{prediction_mlp.2} parent=1 // loop_exit
      _
    %678 = vsyncpa [#allocation3], 1
    %s679 = scalar_lea.sflag [#allocation3], 1
    %680 = vsyncpa %s679, 1
    %681 = vsyncpa [#allocation5], 1

</llo_original>
